<compile_context>
chip_gen: v5e
topology: v5e:2x2
jax: 0.10.0
libtpu: 0.0.40
codegen_flags: <defaults>
</compile_context>

<pallas_src>
import functools

import jax
import jax.numpy as jnp
from jax.experimental import pallas as pl
from jax.experimental.pallas import tpu as pltpu

BN_EPS = 1e-5


def _down_wt_kernel(x_ref, we_ref, wo_ref, sele_ref, selo_ref, b_ref, o_ref, *,
                    n_rows, out_ch):
    """One grid step = one batch element x one tile of `n_rows` output rows.

    x_ref   : (1, C, 2*n_rows, W)   raw NCHW input rows (even/odd rows interleaved)
    we_ref  : (2*OUT, C)            [wa; wb] folded weights applied to even input rows
    wo_ref  : (2*OUT, C)            [wc; wd] folded weights applied to odd  input rows
    sele_ref: (W, W2)               0/1 selector picking even columns
    selo_ref: (W, W2)               0/1 selector picking odd  columns
    b_ref   : (OUT, 1)              folded bias (conv bias + BN)
    o_ref   : (1, OUT, n_rows, W2)  output tile (NCHW)
    """
    w_e = we_ref[...]
    w_o = wo_ref[...]
    sel_e = sele_ref[...]
    sel_o = selo_ref[...]
    bias = b_ref[...]
    # Static unroll over row pairs: per-row loads keep the live vreg set small and give the
    # LLO scheduler full visibility (kernel is DMA-bound; MXU/VPU work here is filler).
    for i in range(n_rows):
        xe = x_ref[0, :, 2 * i, :]        # (C, W)  input row 2*i   (even row of the pair)
        xo = x_ref[0, :, 2 * i + 1, :]    # (C, W)  input row 2*i+1 (odd  row of the pair)
        # Channel contraction with row-parity-dependent weights -> (2*OUT, W).
        uv = (jnp.dot(w_e, xe, preferred_element_type=jnp.float32) +
              jnp.dot(w_o, xo, preferred_element_type=jnp.float32))
        # Even/odd column pairing: out[o, j2] = U[o, 2*j2] + V[o, 2*j2+1] done as two tiny matmuls
        # against constant 0/1 selectors (avoids lane-strided gathers entirely).
        row = (jnp.dot(uv[:out_ch, :], sel_e, preferred_element_type=jnp.float32) +
               jnp.dot(uv[out_ch:, :], sel_o, preferred_element_type=jnp.float32))  # (OUT, W2)
        o_ref[0, :, i, :] = jnp.maximum(row + bias, 0.0).astype(o_ref.dtype)


def down_wt_forward(x, w, bias, gamma, beta, mean, var, *, activations_bf16=False):
    """x: (B, C, H, W) f32.
    w: (4C, OUT) 1x1-conv weight with row blocks ordered [LL | H0 | H1 | H2] (C rows each),
    matching torch.cat([yL, yH[...,0], yH[...,1], yH[...,2]]) for pytorch_wavelets 'haar'/'zero':
      LL = .5(a+b+c+d), H0 = .5(a+b-c-d), H1 = .5(a-b+c-d), H2 = .5(a-b-c+d)
    with a = x[2i,2j], b = x[2i,2j+1], c = x[2i+1,2j], d = x[2i+1,2j+1].
    BatchNorm uses running statistics (inference mode)."""
    B, C, H, W = x.shape
    OUT = w.shape[1]

    # DWTForward(mode='zero') zero-pads odd spatial sizes at the end (haar, length-2 filters).
    if (H % 2) or (W % 2):
        x = jnp.pad(x, ((0, 0), (0, 0), (0, H % 2), (0, W % 2)))
        H, W = x.shape[2], x.shape[3]
    H2, W2 = H // 2, W // 2

    compute_dtype = jnp.bfloat16 if activations_bf16 else jnp.float32

    # ---- host-side folding of DWT + 1x1 conv + inference BN (tiny, trace-time) ---------------
    w0, w1, w2, w3 = w[0:C], w[C:2 * C], w[2 * C:3 * C], w[3 * C:4 * C]       # (C, OUT) each
    wa = 0.5 * (w0 + w1 + w2 + w3).T                                          # (OUT, C): pixel a
    wb = 0.5 * (w0 + w1 - w2 - w3).T                                          # pixel b
    wc = 0.5 * (w0 - w1 + w2 - w3).T                                          # pixel c
    wd = 0.5 * (w0 - w1 - w2 + w3).T                                          # pixel d
    s = gamma.reshape(OUT) * jax.lax.rsqrt(var.reshape(OUT) + BN_EPS)
    wa, wb, wc, wd = (s[:, None] * t for t in (wa, wb, wc, wd))
    b_fold = (s * (bias.reshape(OUT) - mean.reshape(OUT)) + beta.reshape(OUT)).reshape(OUT, 1)

    # Kernel weight layout:  uv[:OUT] (=U) gets the even-column weights, uv[OUT:] (=V) the odd ones.
    w_even_rows = jnp.concatenate([wa, wb], axis=0).astype(compute_dtype)     # (2*OUT, C)
    w_odd_rows = jnp.concatenate([wc, wd], axis=0).astype(compute_dtype)      # (2*OUT, C)

    # Column selectors: sel_e[2*j, j] = 1 and sel_o[2*j+1, j] = 1.
    cols = jnp.arange(W)[:, None]
    j2 = jnp.arange(W2)[None, :]
    sel_e = (cols == 2 * j2).astype(jnp.float32)                              # (W, W2)
    sel_o = (cols == 2 * j2 + 1).astype(jnp.float32)                          # (W, W2)

    # ---- per-generation VMEM budget & row-tile sizing ----------------------------------------
    try:
        vmem_cap = int(pltpu.get_tpu_info().vmem_capacity_bytes)
    except Exception:  # be conservative (v7x has 64 MiB per TensorCore)
        vmem_cap = 64 * 1024 * 1024
    tile_budget = 24 * 1024 * 1024 if vmem_cap <= 64 * 1024 * 1024 else 48 * 1024 * 1024
    vmem_limit = max(24 * 1024 * 1024, min(vmem_cap - 8 * 1024 * 1024, tile_budget + 8 * 1024 * 1024))

    in_item = jnp.dtype(compute_dtype).itemsize
    per_row_in = 2 * C * W * in_item            # input bytes per output row (one row pair)
    per_row_out = OUT * W2 * 4
    # Double-buffered (in + out) tiles must fit the budget; cap the static unroll.
    unroll_cap = 32 if per_row_in >= 16 * 1024 else 64
    max_rows_vmem = max(1, tile_budget // (2 * (per_row_in + per_row_out)))
    rows = min(H2, unroll_cap, max_rows_vmem)
    # Guarantee >=2 parallel grid steps for v7x's second TensorCore when B == 1.
    if B == 1 and rows == H2 and H2 >= 16:
        rows = H2 // 2
    if rows < H2:
        rows = max(8, (rows // 8) * 8)          # block sublane dims must be multiples of 8
        rows = min(rows, H2)
    n_tiles = pl.cdiv(H2, rows)
    th = 2 * rows                               # input rows per tile

    grid = (B, n_tiles)
    kernel = functools.partial(_down_wt_kernel, n_rows=rows, out_ch=OUT)

    # Advisory cost for XLA's scheduler around the custom call.
    flops = int(B * H2 * (8 * OUT * C * W + 4 * OUT * W * W2))
    bytes_acc = int(x.size * in_item + B * OUT * H2 * W2 * 4
                    + 4 * OUT * C * in_item + 2 * W * W2 * 4 + OUT * 4)

    # TODO(synk): optionally bump the x in_spec to pipeline_mode=pl.Buffered(3) (few-% DMA-jitter
    # win); left at the default depth to keep VMEM headroom on v7x.
    out = pl.pallas_call(
        kernel,
        out_shape=jax.ShapeDtypeStruct((B, OUT, H2, W2), jnp.float32),
        grid_spec=pltpu.PrefetchScalarGridSpec(
            num_scalar_prefetch=0,
            grid=grid,
            in_specs=[
                pl.BlockSpec((1, C, th, W), lambda bi, mi: (bi, 0, mi, 0)),      # x rows (lane = W)
                pl.BlockSpec((2 * OUT, C), lambda bi, mi: (0, 0)),               # folded even-row W
                pl.BlockSpec((2 * OUT, C), lambda bi, mi: (0, 0)),               # folded odd-row  W
                pl.BlockSpec((W, W2), lambda bi, mi: (0, 0)),                    # even-col selector
                pl.BlockSpec((W, W2), lambda bi, mi: (0, 0)),                    # odd-col  selector
                pl.BlockSpec((OUT, 1), lambda bi, mi: (0, 0)),                   # folded bias
            ],
            out_specs=pl.BlockSpec((1, OUT, rows, W2), lambda bi, mi: (bi, 0, mi, 0)),
        ),
        compiler_params=pltpu.CompilerParams(
            dimension_semantics=("parallel", "parallel"),
            vmem_limit_bytes=int(vmem_limit),
        ),
        cost_estimate=pl.CostEstimate(flops=flops, transcendentals=0, bytes_accessed=bytes_acc),
    )(x.astype(compute_dtype), w_even_rows, w_odd_rows, sel_e, sel_o,
      b_fold.astype(jnp.float32))

    return out                                                                   # (B, OUT, H2, W2)


def down_wt_reference(x, w, bias, gamma, beta, mean, var):
    """Pure-JAX reference replicating the PyTorch module's math (NCHW; zero-pads odd H/W)."""
    B, C, H, W = x.shape
    OUT = w.shape[1]
    if (H % 2) or (W % 2):
        x = jnp.pad(x, ((0, 0), (0, 0), (0, H % 2), (0, W % 2)))
    a = x[:, :, 0::2, 0::2]
    b = x[:, :, 0::2, 1::2]
    c = x[:, :, 1::2, 0::2]
    d = x[:, :, 1::2, 1::2]
    ll = 0.5 * (a + b + c + d)
    h0 = 0.5 * (a + b - c - d)
    h1 = 0.5 * (a - b + c - d)
    h2 = 0.5 * (a - b - c + d)
    feat = jnp.concatenate([ll, h0, h1, h2], axis=1)              # (B, 4C, H/2, W/2)
    z = jnp.einsum('bkhw,ko->bohw', feat, w) + bias.reshape(1, OUT, 1, 1)
    z = (gamma.reshape(1, OUT, 1, 1) * (z - mean.reshape(1, OUT, 1, 1))
         * jax.lax.rsqrt(var.reshape(1, OUT, 1, 1) + BN_EPS)
         + beta.reshape(1, OUT, 1, 1))
    return jnp.maximum(z, 0.0)


if __name__ == "__main__":
    B, C, H, W = 2, 4, 16, 16        # in_ch = 4
    OUT = 8                          # out_ch = 8

    key = jax.random.PRNGKey(0)
    kx, kw, kb, kg, kbeta, km, kv, kx2 = jax.random.split(key, 8)

    x = jax.random.normal(kx, (B, C, H, W), jnp.float32)

    # Deterministic synthetic parameters (shapes implied by the module's __init__).
    w = 0.1 * jax.random.normal(kw, (4 * C, OUT), jnp.float32)         # Conv2d(4C, OUT, 1x1) weight
    bias = 0.1 * jax.random.normal(kb, (1, OUT), jnp.float32)          # Conv2d bias
    gamma = 1.0 + 0.1 * jax.random.normal(kg, (1, OUT), jnp.float32)   # BN weight
    beta = 0.1 * jax.random.normal(kbeta, (1, OUT), jnp.float32)       # BN bias
    mean = 0.1 * jax.random.normal(km, (1, OUT), jnp.float32)          # BN running_mean
    var = 0.5 + jnp.abs(jax.random.normal(kv, (1, OUT), jnp.float32))  # BN running_var (>0)

    # --- even spatial size -----------------------------------------------------------------
    out = down_wt_forward(x, w, bias, gamma, beta, mean, var)
    out = jax.block_until_ready(out)
    ref = down_wt_reference(x, w, bias, gamma, beta, mean, var)
    assert out.shape == (B, OUT, H // 2, W // 2), out.shape
    err = float(jnp.max(jnp.abs(out - ref)))
    assert jnp.allclose(out, ref, atol=2e-5, rtol=2e-5), err

    # --- odd spatial size (exercises the mode='zero' trailing pad path) ---------------------
    x_odd = jax.random.normal(kx2, (B, C, 15, 17), jnp.float32)
    out_odd = jax.block_until_ready(down_wt_forward(x_odd, w, bias, gamma, beta, mean, var))
    ref_odd = down_wt_reference(x_odd, w, bias, gamma, beta, mean, var)
    assert out_odd.shape == (B, OUT, 8, 9), out_odd.shape
    err_odd = float(jnp.max(jnp.abs(out_odd - ref_odd)))
    assert jnp.allclose(out_odd, ref_odd, atol=2e-5, rtol=2e-5), err_odd

    print("KERNEL_OK")
</pallas_src>

<mosaic_0001>
module attributes {stable_mosaic.version = 11 : i64} {
  func.func @_down_wt_kernel(%arg0: i32, %arg1: i32, %arg2: memref<1x4x16x16xf32, #tpu.memory_space<vmem>>, %arg3: memref<16x4xf32, #tpu.memory_space<vmem>>, %arg4: memref<16x4xf32, #tpu.memory_space<vmem>>, %arg5: memref<16x8xf32, #tpu.memory_space<vmem>>, %arg6: memref<16x8xf32, #tpu.memory_space<vmem>>, %arg7: memref<8x1xf32, #tpu.memory_space<vmem>>, %arg8: memref<1x8x8x8xf32, #tpu.memory_space<vmem>>) attributes {dimension_semantics = [#tpu.dimension_semantics<parallel>, #tpu.dimension_semantics<parallel>], iteration_bounds = array<i64: 2, 1>, scalar_prefetch = 0 : i64, scratch_operands = 0 : i64, tpu.core_type = #tpu.core_type<tc>, window_params = [{transform_indices = @transform_0, window_bounds = array<i64: 1, 4, 16, 16>}, {pipeline_mode = #tpu.pipeline_mode<synchronous>, transform_indices = @transform_1, window_bounds = array<i64: 16, 4>}, {pipeline_mode = #tpu.pipeline_mode<synchronous>, transform_indices = @transform_2, window_bounds = array<i64: 16, 4>}, {pipeline_mode = #tpu.pipeline_mode<synchronous>, transform_indices = @transform_3, window_bounds = array<i64: 16, 8>}, {pipeline_mode = #tpu.pipeline_mode<synchronous>, transform_indices = @transform_4, window_bounds = array<i64: 16, 8>}, {pipeline_mode = #tpu.pipeline_mode<synchronous>, transform_indices = @transform_5, window_bounds = array<i64: 8, 1>}, {transform_indices = @transform_6, window_bounds = array<i64: 1, 8, 8, 8>}]} {
    %c0 = arith.constant 0 : index
    %c0_0 = arith.constant 0 : index
    %0 = vector.load %arg3[%c0, %c0_0] : memref<16x4xf32, #tpu.memory_space<vmem>>, vector<16x4xf32>
    %c0_1 = arith.constant 0 : index
    %c0_2 = arith.constant 0 : index
    %1 = vector.load %arg4[%c0_1, %c0_2] : memref<16x4xf32, #tpu.memory_space<vmem>>, vector<16x4xf32>
    %c0_3 = arith.constant 0 : index
    %c0_4 = arith.constant 0 : index
    %2 = vector.load %arg5[%c0_3, %c0_4] : memref<16x8xf32, #tpu.memory_space<vmem>>, vector<16x8xf32>
    %c0_5 = arith.constant 0 : index
    %c0_6 = arith.constant 0 : index
    %3 = vector.load %arg6[%c0_5, %c0_6] : memref<16x8xf32, #tpu.memory_space<vmem>>, vector<16x8xf32>
    %c0_7 = arith.constant 0 : index
    %c0_8 = arith.constant 0 : index
    %4 = vector.load %arg7[%c0_7, %c0_8] : memref<8x1xf32, #tpu.memory_space<vmem>>, vector<8x1xf32>
    %c0_9 = arith.constant 0 : index
    %c0_10 = arith.constant 0 : index
    %c0_11 = arith.constant 0 : index
    %c0_12 = arith.constant 0 : index
    %5 = vector.load %arg2[%c0_9, %c0_10, %c0_11, %c0_12] : memref<1x4x16x16xf32, #tpu.memory_space<vmem>>, vector<1x4x1x16xf32>
    %6 = vector.shape_cast %5 : vector<1x4x1x16xf32> to vector<4x16xf32>
    %c0_13 = arith.constant 0 : index
    %c0_14 = arith.constant 0 : index
    %c1 = arith.constant 1 : index
    %c0_15 = arith.constant 0 : index
    %7 = vector.load %arg2[%c0_13, %c0_14, %c1, %c0_15] : memref<1x4x16x16xf32, #tpu.memory_space<vmem>>, vector<1x4x1x16xf32>
    %8 = vector.shape_cast %7 : vector<1x4x1x16xf32> to vector<4x16xf32>
    %cst = arith.constant dense<0.000000e+00> : vector<16x16xf32>
    %9 = tpu.matmul %0, %6, %cst {dimension_numbers = #tpu.dot_dimension_numbers<[1], [0], [0], [1], [0, 0, 1, 1], [], []>} : vector<16x4xf32>, vector<4x16xf32>, vector<16x16xf32> -> vector<16x16xf32>
    %cst_16 = arith.constant dense<0.000000e+00> : vector<16x16xf32>
    %10 = tpu.matmul %1, %8, %cst_16 {dimension_numbers = #tpu.dot_dimension_numbers<[1], [0], [0], [1], [0, 0, 1, 1], [], []>} : vector<16x4xf32>, vector<4x16xf32>, vector<16x16xf32> -> vector<16x16xf32>
    %11 = arith.addf %9, %10 : vector<16x16xf32>
    %12 = vector.extract_strided_slice %11 {offsets = [0, 0], sizes = [8, 16], strides = [1, 1]} : vector<16x16xf32> to vector<8x16xf32>
    %cst_17 = arith.constant dense<0.000000e+00> : vector<8x8xf32>
    %13 = tpu.matmul %12, %2, %cst_17 {dimension_numbers = #tpu.dot_dimension_numbers<[1], [0], [0], [1], [0, 0, 1, 1], [], []>} : vector<8x16xf32>, vector<16x8xf32>, vector<8x8xf32> -> vector<8x8xf32>
    %14 = vector.extract_strided_slice %11 {offsets = [8, 0], sizes = [8, 16], strides = [1, 1]} : vector<16x16xf32> to vector<8x16xf32>
    %cst_18 = arith.constant dense<0.000000e+00> : vector<8x8xf32>
    %15 = tpu.matmul %14, %3, %cst_18 {dimension_numbers = #tpu.dot_dimension_numbers<[1], [0], [0], [1], [0, 0, 1, 1], [], []>} : vector<8x16xf32>, vector<16x8xf32>, vector<8x8xf32> -> vector<8x8xf32>
    %16 = arith.addf %13, %15 : vector<8x8xf32>
    %17 = vector.broadcast %4 : vector<8x1xf32> to vector<8x8xf32>
    %18 = arith.addf %16, %17 : vector<8x8xf32>
    %cst_19 = arith.constant 0.000000e+00 : f32
    %19 = vector.broadcast %cst_19 : f32 to vector<8x8xf32>
    %20 = arith.maximumf %18, %19 : vector<8x8xf32>
    %c0_20 = arith.constant 0 : index
    %c0_21 = arith.constant 0 : index
    %c0_22 = arith.constant 0 : index
    %c0_23 = arith.constant 0 : index
    %21 = vector.load %arg8[%c0_20, %c0_21, %c0_22, %c0_23] : memref<1x8x8x8xf32, #tpu.memory_space<vmem>>, vector<1x8x1x8xf32>
    %22 = vector.shape_cast %21 : vector<1x8x1x8xf32> to vector<8x8xf32>
    %23 = vector.shape_cast %20 : vector<8x8xf32> to vector<1x8x1x8xf32>
    tpu.vector_store %arg8[%c0_20, %c0_21, %c0_22, %c0_23], %23 {strides = array<i32>} : memref<1x8x8x8xf32, #tpu.memory_space<vmem>>, vector<1x8x1x8xf32>,
    %c0_24 = arith.constant 0 : index
    %c0_25 = arith.constant 0 : index
    %c2 = arith.constant 2 : index
    %c0_26 = arith.constant 0 : index
    %24 = vector.load %arg2[%c0_24, %c0_25, %c2, %c0_26] : memref<1x4x16x16xf32, #tpu.memory_space<vmem>>, vector<1x4x1x16xf32>
    %25 = vector.shape_cast %24 : vector<1x4x1x16xf32> to vector<4x16xf32>
    %c0_27 = arith.constant 0 : index
    %c0_28 = arith.constant 0 : index
    %c3 = arith.constant 3 : index
    %c0_29 = arith.constant 0 : index
    %26 = vector.load %arg2[%c0_27, %c0_28, %c3, %c0_29] : memref<1x4x16x16xf32, #tpu.memory_space<vmem>>, vector<1x4x1x16xf32>
    %27 = vector.shape_cast %26 : vector<1x4x1x16xf32> to vector<4x16xf32>
    %cst_30 = arith.constant dense<0.000000e+00> : vector<16x16xf32>
    %28 = tpu.matmul %0, %25, %cst_30 {dimension_numbers = #tpu.dot_dimension_numbers<[1], [0], [0], [1], [0, 0, 1, 1], [], []>} : vector<16x4xf32>, vector<4x16xf32>, vector<16x16xf32> -> vector<16x16xf32>
    %cst_31 = arith.constant dense<0.000000e+00> : vector<16x16xf32>
    %29 = tpu.matmul %1, %27, %cst_31 {dimension_numbers = #tpu.dot_dimension_numbers<[1], [0], [0], [1], [0, 0, 1, 1], [], []>} : vector<16x4xf32>, vector<4x16xf32>, vector<16x16xf32> -> vector<16x16xf32>
    %30 = arith.addf %28, %29 : vector<16x16xf32>
    %31 = vector.extract_strided_slice %30 {offsets = [0, 0], sizes = [8, 16], strides = [1, 1]} : vector<16x16xf32> to vector<8x16xf32>
    %cst_32 = arith.constant dense<0.000000e+00> : vector<8x8xf32>
    %32 = tpu.matmul %31, %2, %cst_32 {dimension_numbers = #tpu.dot_dimension_numbers<[1], [0], [0], [1], [0, 0, 1, 1], [], []>} : vector<8x16xf32>, vector<16x8xf32>, vector<8x8xf32> -> vector<8x8xf32>
    %33 = vector.extract_strided_slice %30 {offsets = [8, 0], sizes = [8, 16], strides = [1, 1]} : vector<16x16xf32> to vector<8x16xf32>
    %cst_33 = arith.constant dense<0.000000e+00> : vector<8x8xf32>
    %34 = tpu.matmul %33, %3, %cst_33 {dimension_numbers = #tpu.dot_dimension_numbers<[1], [0], [0], [1], [0, 0, 1, 1], [], []>} : vector<8x16xf32>, vector<16x8xf32>, vector<8x8xf32> -> vector<8x8xf32>
    %35 = arith.addf %32, %34 : vector<8x8xf32>
    %36 = vector.broadcast %4 : vector<8x1xf32> to vector<8x8xf32>
    %37 = arith.addf %35, %36 : vector<8x8xf32>
    %cst_34 = arith.constant 0.000000e+00 : f32
    %38 = vector.broadcast %cst_34 : f32 to vector<8x8xf32>
    %39 = arith.maximumf %37, %38 : vector<8x8xf32>
    %c0_35 = arith.constant 0 : index
    %c0_36 = arith.constant 0 : index
    %c1_37 = arith.constant 1 : index
    %c0_38 = arith.constant 0 : index
    %40 = vector.load %arg8[%c0_35, %c0_36, %c1_37, %c0_38] : memref<1x8x8x8xf32, #tpu.memory_space<vmem>>, vector<1x8x1x8xf32>
    %41 = vector.shape_cast %40 : vector<1x8x1x8xf32> to vector<8x8xf32>
    %42 = vector.shape_cast %39 : vector<8x8xf32> to vector<1x8x1x8xf32>
    tpu.vector_store %arg8[%c0_35, %c0_36, %c1_37, %c0_38], %42 {strides = array<i32>} : memref<1x8x8x8xf32, #tpu.memory_space<vmem>>, vector<1x8x1x8xf32>,
    %c0_39 = arith.constant 0 : index
    %c0_40 = arith.constant 0 : index
    %c4 = arith.constant 4 : index
    %c0_41 = arith.constant 0 : index
    %43 = vector.load %arg2[%c0_39, %c0_40, %c4, %c0_41] : memref<1x4x16x16xf32, #tpu.memory_space<vmem>>, vector<1x4x1x16xf32>
    %44 = vector.shape_cast %43 : vector<1x4x1x16xf32> to vector<4x16xf32>
    %c0_42 = arith.constant 0 : index
    %c0_43 = arith.constant 0 : index
    %c5 = arith.constant 5 : index
    %c0_44 = arith.constant 0 : index
    %45 = vector.load %arg2[%c0_42, %c0_43, %c5, %c0_44] : memref<1x4x16x16xf32, #tpu.memory_space<vmem>>, vector<1x4x1x16xf32>
    %46 = vector.shape_cast %45 : vector<1x4x1x16xf32> to vector<4x16xf32>
    %cst_45 = arith.constant dense<0.000000e+00> : vector<16x16xf32>
    %47 = tpu.matmul %0, %44, %cst_45 {dimension_numbers = #tpu.dot_dimension_numbers<[1], [0], [0], [1], [0, 0, 1, 1], [], []>} : vector<16x4xf32>, vector<4x16xf32>, vector<16x16xf32> -> vector<16x16xf32>
    %cst_46 = arith.constant dense<0.000000e+00> : vector<16x16xf32>
    %48 = tpu.matmul %1, %46, %cst_46 {dimension_numbers = #tpu.dot_dimension_numbers<[1], [0], [0], [1], [0, 0, 1, 1], [], []>} : vector<16x4xf32>, vector<4x16xf32>, vector<16x16xf32> -> vector<16x16xf32>
    %49 = arith.addf %47, %48 : vector<16x16xf32>
    %50 = vector.extract_strided_slice %49 {offsets = [0, 0], sizes = [8, 16], strides = [1, 1]} : vector<16x16xf32> to vector<8x16xf32>
    %cst_47 = arith.constant dense<0.000000e+00> : vector<8x8xf32>
    %51 = tpu.matmul %50, %2, %cst_47 {dimension_numbers = #tpu.dot_dimension_numbers<[1], [0], [0], [1], [0, 0, 1, 1], [], []>} : vector<8x16xf32>, vector<16x8xf32>, vector<8x8xf32> -> vector<8x8xf32>
    %52 = vector.extract_strided_slice %49 {offsets = [8, 0], sizes = [8, 16], strides = [1, 1]} : vector<16x16xf32> to vector<8x16xf32>
    %cst_48 = arith.constant dense<0.000000e+00> : vector<8x8xf32>
    %53 = tpu.matmul %52, %3, %cst_48 {dimension_numbers = #tpu.dot_dimension_numbers<[1], [0], [0], [1], [0, 0, 1, 1], [], []>} : vector<8x16xf32>, vector<16x8xf32>, vector<8x8xf32> -> vector<8x8xf32>
    %54 = arith.addf %51, %53 : vector<8x8xf32>
    %55 = vector.broadcast %4 : vector<8x1xf32> to vector<8x8xf32>
    %56 = arith.addf %54, %55 : vector<8x8xf32>
    %cst_49 = arith.constant 0.000000e+00 : f32
    %57 = vector.broadcast %cst_49 : f32 to vector<8x8xf32>
    %58 = arith.maximumf %56, %57 : vector<8x8xf32>
    %c0_50 = arith.constant 0 : index
    %c0_51 = arith.constant 0 : index
    %c2_52 = arith.constant 2 : index
    %c0_53 = arith.constant 0 : index
    %59 = vector.load %arg8[%c0_50, %c0_51, %c2_52, %c0_53] : memref<1x8x8x8xf32, #tpu.memory_space<vmem>>, vector<1x8x1x8xf32>
    %60 = vector.shape_cast %59 : vector<1x8x1x8xf32> to vector<8x8xf32>
    %61 = vector.shape_cast %58 : vector<8x8xf32> to vector<1x8x1x8xf32>
    tpu.vector_store %arg8[%c0_50, %c0_51, %c2_52, %c0_53], %61 {strides = array<i32>} : memref<1x8x8x8xf32, #tpu.memory_space<vmem>>, vector<1x8x1x8xf32>,
    %c0_54 = arith.constant 0 : index
    %c0_55 = arith.constant 0 : index
    %c6 = arith.constant 6 : index
    %c0_56 = arith.constant 0 : index
    %62 = vector.load %arg2[%c0_54, %c0_55, %c6, %c0_56] : memref<1x4x16x16xf32, #tpu.memory_space<vmem>>, vector<1x4x1x16xf32>
    %63 = vector.shape_cast %62 : vector<1x4x1x16xf32> to vector<4x16xf32>
    %c0_57 = arith.constant 0 : index
    %c0_58 = arith.constant 0 : index
    %c7 = arith.constant 7 : index
    %c0_59 = arith.constant 0 : index
    %64 = vector.load %arg2[%c0_57, %c0_58, %c7, %c0_59] : memref<1x4x16x16xf32, #tpu.memory_space<vmem>>, vector<1x4x1x16xf32>
    %65 = vector.shape_cast %64 : vector<1x4x1x16xf32> to vector<4x16xf32>
    %cst_60 = arith.constant dense<0.000000e+00> : vector<16x16xf32>
    %66 = tpu.matmul %0, %63, %cst_60 {dimension_numbers = #tpu.dot_dimension_numbers<[1], [0], [0], [1], [0, 0, 1, 1], [], []>} : vector<16x4xf32>, vector<4x16xf32>, vector<16x16xf32> -> vector<16x16xf32>
    %cst_61 = arith.constant dense<0.000000e+00> : vector<16x16xf32>
    %67 = tpu.matmul %1, %65, %cst_61 {dimension_numbers = #tpu.dot_dimension_numbers<[1], [0], [0], [1], [0, 0, 1, 1], [], []>} : vector<16x4xf32>, vector<4x16xf32>, vector<16x16xf32> -> vector<16x16xf32>
    %68 = arith.addf %66, %67 : vector<16x16xf32>
    %69 = vector.extract_strided_slice %68 {offsets = [0, 0], sizes = [8, 16], strides = [1, 1]} : vector<16x16xf32> to vector<8x16xf32>
    %cst_62 = arith.constant dense<0.000000e+00> : vector<8x8xf32>
    %70 = tpu.matmul %69, %2, %cst_62 {dimension_numbers = #tpu.dot_dimension_numbers<[1], [0], [0], [1], [0, 0, 1, 1], [], []>} : vector<8x16xf32>, vector<16x8xf32>, vector<8x8xf32> -> vector<8x8xf32>
    %71 = vector.extract_strided_slice %68 {offsets = [8, 0], sizes = [8, 16], strides = [1, 1]} : vector<16x16xf32> to vector<8x16xf32>
    %cst_63 = arith.constant dense<0.000000e+00> : vector<8x8xf32>
    %72 = tpu.matmul %71, %3, %cst_63 {dimension_numbers = #tpu.dot_dimension_numbers<[1], [0], [0], [1], [0, 0, 1, 1], [], []>} : vector<8x16xf32>, vector<16x8xf32>, vector<8x8xf32> -> vector<8x8xf32>
    %73 = arith.addf %70, %72 : vector<8x8xf32>
    %74 = vector.broadcast %4 : vector<8x1xf32> to vector<8x8xf32>
    %75 = arith.addf %73, %74 : vector<8x8xf32>
    %cst_64 = arith.constant 0.000000e+00 : f32
    %76 = vector.broadcast %cst_64 : f32 to vector<8x8xf32>
    %77 = arith.maximumf %75, %76 : vector<8x8xf32>
    %c0_65 = arith.constant 0 : index
    %c0_66 = arith.constant 0 : index
    %c3_67 = arith.constant 3 : index
    %c0_68 = arith.constant 0 : index
    %78 = vector.load %arg8[%c0_65, %c0_66, %c3_67, %c0_68] : memref<1x8x8x8xf32, #tpu.memory_space<vmem>>, vector<1x8x1x8xf32>
    %79 = vector.shape_cast %78 : vector<1x8x1x8xf32> to vector<8x8xf32>
    %80 = vector.shape_cast %77 : vector<8x8xf32> to vector<1x8x1x8xf32>
    tpu.vector_store %arg8[%c0_65, %c0_66, %c3_67, %c0_68], %80 {strides = array<i32>} : memref<1x8x8x8xf32, #tpu.memory_space<vmem>>, vector<1x8x1x8xf32>,
    %c0_69 = arith.constant 0 : index
    %c0_70 = arith.constant 0 : index
    %c8 = arith.constant 8 : index
    %c0_71 = arith.constant 0 : index
    %81 = vector.load %arg2[%c0_69, %c0_70, %c8, %c0_71] : memref<1x4x16x16xf32, #tpu.memory_space<vmem>>, vector<1x4x1x16xf32>
    %82 = vector.shape_cast %81 : vector<1x4x1x16xf32> to vector<4x16xf32>
    %c0_72 = arith.constant 0 : index
    %c0_73 = arith.constant 0 : index
    %c9 = arith.constant 9 : index
    %c0_74 = arith.constant 0 : index
    %83 = vector.load %arg2[%c0_72, %c0_73, %c9, %c0_74] : memref<1x4x16x16xf32, #tpu.memory_space<vmem>>, vector<1x4x1x16xf32>
    %84 = vector.shape_cast %83 : vector<1x4x1x16xf32> to vector<4x16xf32>
    %cst_75 = arith.constant dense<0.000000e+00> : vector<16x16xf32>
    %85 = tpu.matmul %0, %82, %cst_75 {dimension_numbers = #tpu.dot_dimension_numbers<[1], [0], [0], [1], [0, 0, 1, 1], [], []>} : vector<16x4xf32>, vector<4x16xf32>, vector<16x16xf32> -> vector<16x16xf32>
    %cst_76 = arith.constant dense<0.000000e+00> : vector<16x16xf32>
    %86 = tpu.matmul %1, %84, %cst_76 {dimension_numbers = #tpu.dot_dimension_numbers<[1], [0], [0], [1], [0, 0, 1, 1], [], []>} : vector<16x4xf32>, vector<4x16xf32>, vector<16x16xf32> -> vector<16x16xf32>
    %87 = arith.addf %85, %86 : vector<16x16xf32>
    %88 = vector.extract_strided_slice %87 {offsets = [0, 0], sizes = [8, 16], strides = [1, 1]} : vector<16x16xf32> to vector<8x16xf32>
    %cst_77 = arith.constant dense<0.000000e+00> : vector<8x8xf32>
    %89 = tpu.matmul %88, %2, %cst_77 {dimension_numbers = #tpu.dot_dimension_numbers<[1], [0], [0], [1], [0, 0, 1, 1], [], []>} : vector<8x16xf32>, vector<16x8xf32>, vector<8x8xf32> -> vector<8x8xf32>
    %90 = vector.extract_strided_slice %87 {offsets = [8, 0], sizes = [8, 16], strides = [1, 1]} : vector<16x16xf32> to vector<8x16xf32>
    %cst_78 = arith.constant dense<0.000000e+00> : vector<8x8xf32>
    %91 = tpu.matmul %90, %3, %cst_78 {dimension_numbers = #tpu.dot_dimension_numbers<[1], [0], [0], [1], [0, 0, 1, 1], [], []>} : vector<8x16xf32>, vector<16x8xf32>, vector<8x8xf32> -> vector<8x8xf32>
    %92 = arith.addf %89, %91 : vector<8x8xf32>
    %93 = vector.broadcast %4 : vector<8x1xf32> to vector<8x8xf32>
    %94 = arith.addf %92, %93 : vector<8x8xf32>
    %cst_79 = arith.constant 0.000000e+00 : f32
    %95 = vector.broadcast %cst_79 : f32 to vector<8x8xf32>
    %96 = arith.maximumf %94, %95 : vector<8x8xf32>
    %c0_80 = arith.constant 0 : index
    %c0_81 = arith.constant 0 : index
    %c4_82 = arith.constant 4 : index
    %c0_83 = arith.constant 0 : index
    %97 = vector.load %arg8[%c0_80, %c0_81, %c4_82, %c0_83] : memref<1x8x8x8xf32, #tpu.memory_space<vmem>>, vector<1x8x1x8xf32>
    %98 = vector.shape_cast %97 : vector<1x8x1x8xf32> to vector<8x8xf32>
    %99 = vector.shape_cast %96 : vector<8x8xf32> to vector<1x8x1x8xf32>
    tpu.vector_store %arg8[%c0_80, %c0_81, %c4_82, %c0_83], %99 {strides = array<i32>} : memref<1x8x8x8xf32, #tpu.memory_space<vmem>>, vector<1x8x1x8xf32>,
    %c0_84 = arith.constant 0 : index
    %c0_85 = arith.constant 0 : index
    %c10 = arith.constant 10 : index
    %c0_86 = arith.constant 0 : index
    %100 = vector.load %arg2[%c0_84, %c0_85, %c10, %c0_86] : memref<1x4x16x16xf32, #tpu.memory_space<vmem>>, vector<1x4x1x16xf32>
    %101 = vector.shape_cast %100 : vector<1x4x1x16xf32> to vector<4x16xf32>
    %c0_87 = arith.constant 0 : index
    %c0_88 = arith.constant 0 : index
    %c11 = arith.constant 11 : index
    %c0_89 = arith.constant 0 : index
    %102 = vector.load %arg2[%c0_87, %c0_88, %c11, %c0_89] : memref<1x4x16x16xf32, #tpu.memory_space<vmem>>, vector<1x4x1x16xf32>
    %103 = vector.shape_cast %102 : vector<1x4x1x16xf32> to vector<4x16xf32>
    %cst_90 = arith.constant dense<0.000000e+00> : vector<16x16xf32>
    %104 = tpu.matmul %0, %101, %cst_90 {dimension_numbers = #tpu.dot_dimension_numbers<[1], [0], [0], [1], [0, 0, 1, 1], [], []>} : vector<16x4xf32>, vector<4x16xf32>, vector<16x16xf32> -> vector<16x16xf32>
    %cst_91 = arith.constant dense<0.000000e+00> : vector<16x16xf32>
    %105 = tpu.matmul %1, %103, %cst_91 {dimension_numbers = #tpu.dot_dimension_numbers<[1], [0], [0], [1], [0, 0, 1, 1], [], []>} : vector<16x4xf32>, vector<4x16xf32>, vector<16x16xf32> -> vector<16x16xf32>
    %106 = arith.addf %104, %105 : vector<16x16xf32>
    %107 = vector.extract_strided_slice %106 {offsets = [0, 0], sizes = [8, 16], strides = [1, 1]} : vector<16x16xf32> to vector<8x16xf32>
    %cst_92 = arith.constant dense<0.000000e+00> : vector<8x8xf32>
    %108 = tpu.matmul %107, %2, %cst_92 {dimension_numbers = #tpu.dot_dimension_numbers<[1], [0], [0], [1], [0, 0, 1, 1], [], []>} : vector<8x16xf32>, vector<16x8xf32>, vector<8x8xf32> -> vector<8x8xf32>
    %109 = vector.extract_strided_slice %106 {offsets = [8, 0], sizes = [8, 16], strides = [1, 1]} : vector<16x16xf32> to vector<8x16xf32>
    %cst_93 = arith.constant dense<0.000000e+00> : vector<8x8xf32>
    %110 = tpu.matmul %109, %3, %cst_93 {dimension_numbers = #tpu.dot_dimension_numbers<[1], [0], [0], [1], [0, 0, 1, 1], [], []>} : vector<8x16xf32>, vector<16x8xf32>, vector<8x8xf32> -> vector<8x8xf32>
    %111 = arith.addf %108, %110 : vector<8x8xf32>
    %112 = vector.broadcast %4 : vector<8x1xf32> to vector<8x8xf32>
    %113 = arith.addf %111, %112 : vector<8x8xf32>
    %cst_94 = arith.constant 0.000000e+00 : f32
    %114 = vector.broadcast %cst_94 : f32 to vector<8x8xf32>
    %115 = arith.maximumf %113, %114 : vector<8x8xf32>
    %c0_95 = arith.constant 0 : index
    %c0_96 = arith.constant 0 : index
    %c5_97 = arith.constant 5 : index
    %c0_98 = arith.constant 0 : index
    %116 = vector.load %arg8[%c0_95, %c0_96, %c5_97, %c0_98] : memref<1x8x8x8xf32, #tpu.memory_space<vmem>>, vector<1x8x1x8xf32>
    %117 = vector.shape_cast %116 : vector<1x8x1x8xf32> to vector<8x8xf32>
    %118 = vector.shape_cast %115 : vector<8x8xf32> to vector<1x8x1x8xf32>
    tpu.vector_store %arg8[%c0_95, %c0_96, %c5_97, %c0_98], %118 {strides = array<i32>} : memref<1x8x8x8xf32, #tpu.memory_space<vmem>>, vector<1x8x1x8xf32>,
    %c0_99 = arith.constant 0 : index
    %c0_100 = arith.constant 0 : index
    %c12 = arith.constant 12 : index
    %c0_101 = arith.constant 0 : index
    %119 = vector.load %arg2[%c0_99, %c0_100, %c12, %c0_101] : memref<1x4x16x16xf32, #tpu.memory_space<vmem>>, vector<1x4x1x16xf32>
    %120 = vector.shape_cast %119 : vector<1x4x1x16xf32> to vector<4x16xf32>
    %c0_102 = arith.constant 0 : index
    %c0_103 = arith.constant 0 : index
    %c13 = arith.constant 13 : index
    %c0_104 = arith.constant 0 : index
    %121 = vector.load %arg2[%c0_102, %c0_103, %c13, %c0_104] : memref<1x4x16x16xf32, #tpu.memory_space<vmem>>, vector<1x4x1x16xf32>
    %122 = vector.shape_cast %121 : vector<1x4x1x16xf32> to vector<4x16xf32>
    %cst_105 = arith.constant dense<0.000000e+00> : vector<16x16xf32>
    %123 = tpu.matmul %0, %120, %cst_105 {dimension_numbers = #tpu.dot_dimension_numbers<[1], [0], [0], [1], [0, 0, 1, 1], [], []>} : vector<16x4xf32>, vector<4x16xf32>, vector<16x16xf32> -> vector<16x16xf32>
    %cst_106 = arith.constant dense<0.000000e+00> : vector<16x16xf32>
    %124 = tpu.matmul %1, %122, %cst_106 {dimension_numbers = #tpu.dot_dimension_numbers<[1], [0], [0], [1], [0, 0, 1, 1], [], []>} : vector<16x4xf32>, vector<4x16xf32>, vector<16x16xf32> -> vector<16x16xf32>
    %125 = arith.addf %123, %124 : vector<16x16xf32>
    %126 = vector.extract_strided_slice %125 {offsets = [0, 0], sizes = [8, 16], strides = [1, 1]} : vector<16x16xf32> to vector<8x16xf32>
    %cst_107 = arith.constant dense<0.000000e+00> : vector<8x8xf32>
    %127 = tpu.matmul %126, %2, %cst_107 {dimension_numbers = #tpu.dot_dimension_numbers<[1], [0], [0], [1], [0, 0, 1, 1], [], []>} : vector<8x16xf32>, vector<16x8xf32>, vector<8x8xf32> -> vector<8x8xf32>
    %128 = vector.extract_strided_slice %125 {offsets = [8, 0], sizes = [8, 16], strides = [1, 1]} : vector<16x16xf32> to vector<8x16xf32>
    %cst_108 = arith.constant dense<0.000000e+00> : vector<8x8xf32>
    %129 = tpu.matmul %128, %3, %cst_108 {dimension_numbers = #tpu.dot_dimension_numbers<[1], [0], [0], [1], [0, 0, 1, 1], [], []>} : vector<8x16xf32>, vector<16x8xf32>, vector<8x8xf32> -> vector<8x8xf32>
    %130 = arith.addf %127, %129 : vector<8x8xf32>
    %131 = vector.broadcast %4 : vector<8x1xf32> to vector<8x8xf32>
    %132 = arith.addf %130, %131 : vector<8x8xf32>
    %cst_109 = arith.constant 0.000000e+00 : f32
    %133 = vector.broadcast %cst_109 : f32 to vector<8x8xf32>
    %134 = arith.maximumf %132, %133 : vector<8x8xf32>
    %c0_110 = arith.constant 0 : index
    %c0_111 = arith.constant 0 : index
    %c6_112 = arith.constant 6 : index
    %c0_113 = arith.constant 0 : index
    %135 = vector.load %arg8[%c0_110, %c0_111, %c6_112, %c0_113] : memref<1x8x8x8xf32, #tpu.memory_space<vmem>>, vector<1x8x1x8xf32>
    %136 = vector.shape_cast %135 : vector<1x8x1x8xf32> to vector<8x8xf32>
    %137 = vector.shape_cast %134 : vector<8x8xf32> to vector<1x8x1x8xf32>
    tpu.vector_store %arg8[%c0_110, %c0_111, %c6_112, %c0_113], %137 {strides = array<i32>} : memref<1x8x8x8xf32, #tpu.memory_space<vmem>>, vector<1x8x1x8xf32>,
    %c0_114 = arith.constant 0 : index
    %c0_115 = arith.constant 0 : index
    %c14 = arith.constant 14 : index
    %c0_116 = arith.constant 0 : index
    %138 = vector.load %arg2[%c0_114, %c0_115, %c14, %c0_116] : memref<1x4x16x16xf32, #tpu.memory_space<vmem>>, vector<1x4x1x16xf32>
    %139 = vector.shape_cast %138 : vector<1x4x1x16xf32> to vector<4x16xf32>
    %c0_117 = arith.constant 0 : index
    %c0_118 = arith.constant 0 : index
    %c15 = arith.constant 15 : index
    %c0_119 = arith.constant 0 : index
    %140 = vector.load %arg2[%c0_117, %c0_118, %c15, %c0_119] : memref<1x4x16x16xf32, #tpu.memory_space<vmem>>, vector<1x4x1x16xf32>
    %141 = vector.shape_cast %140 : vector<1x4x1x16xf32> to vector<4x16xf32>
    %cst_120 = arith.constant dense<0.000000e+00> : vector<16x16xf32>
    %142 = tpu.matmul %0, %139, %cst_120 {dimension_numbers = #tpu.dot_dimension_numbers<[1], [0], [0], [1], [0, 0, 1, 1], [], []>} : vector<16x4xf32>, vector<4x16xf32>, vector<16x16xf32> -> vector<16x16xf32>
    %cst_121 = arith.constant dense<0.000000e+00> : vector<16x16xf32>
    %143 = tpu.matmul %1, %141, %cst_121 {dimension_numbers = #tpu.dot_dimension_numbers<[1], [0], [0], [1], [0, 0, 1, 1], [], []>} : vector<16x4xf32>, vector<4x16xf32>, vector<16x16xf32> -> vector<16x16xf32>
    %144 = arith.addf %142, %143 : vector<16x16xf32>
    %145 = vector.extract_strided_slice %144 {offsets = [0, 0], sizes = [8, 16], strides = [1, 1]} : vector<16x16xf32> to vector<8x16xf32>
    %cst_122 = arith.constant dense<0.000000e+00> : vector<8x8xf32>
    %146 = tpu.matmul %145, %2, %cst_122 {dimension_numbers = #tpu.dot_dimension_numbers<[1], [0], [0], [1], [0, 0, 1, 1], [], []>} : vector<8x16xf32>, vector<16x8xf32>, vector<8x8xf32> -> vector<8x8xf32>
    %147 = vector.extract_strided_slice %144 {offsets = [8, 0], sizes = [8, 16], strides = [1, 1]} : vector<16x16xf32> to vector<8x16xf32>
    %cst_123 = arith.constant dense<0.000000e+00> : vector<8x8xf32>
    %148 = tpu.matmul %147, %3, %cst_123 {dimension_numbers = #tpu.dot_dimension_numbers<[1], [0], [0], [1], [0, 0, 1, 1], [], []>} : vector<8x16xf32>, vector<16x8xf32>, vector<8x8xf32> -> vector<8x8xf32>
    %149 = arith.addf %146, %148 : vector<8x8xf32>
    %150 = vector.broadcast %4 : vector<8x1xf32> to vector<8x8xf32>
    %151 = arith.addf %149, %150 : vector<8x8xf32>
    %cst_124 = arith.constant 0.000000e+00 : f32
    %152 = vector.broadcast %cst_124 : f32 to vector<8x8xf32>
    %153 = arith.maximumf %151, %152 : vector<8x8xf32>
    %c0_125 = arith.constant 0 : index
    %c0_126 = arith.constant 0 : index
    %c7_127 = arith.constant 7 : index
    %c0_128 = arith.constant 0 : index
    %154 = vector.load %arg8[%c0_125, %c0_126, %c7_127, %c0_128] : memref<1x8x8x8xf32, #tpu.memory_space<vmem>>, vector<1x8x1x8xf32>
    %155 = vector.shape_cast %154 : vector<1x8x1x8xf32> to vector<8x8xf32>
    %156 = vector.shape_cast %153 : vector<8x8xf32> to vector<1x8x1x8xf32>
    tpu.vector_store %arg8[%c0_125, %c0_126, %c7_127, %c0_128], %156 {strides = array<i32>} : memref<1x8x8x8xf32, #tpu.memory_space<vmem>>, vector<1x8x1x8xf32>,
    return
  }
  func.func @transform_0(%arg0: i32, %arg1: i32) -> (i32, i32, i32, i32) {
    %c0_i32 = arith.constant 0 : i32
    %c0_i32_0 = arith.constant 0 : i32
    %c0_i32_1 = arith.constant 0 : i32
    return %arg0, %c0_i32, %arg1, %c0_i32_0 : i32, i32, i32, i32
  }
  func.func @transform_1(%arg0: i32, %arg1: i32) -> (i32, i32) {
    %c0_i32 = arith.constant 0 : i32
    %c0_i32_0 = arith.constant 0 : i32
    %c0_i32_1 = arith.constant 0 : i32
    return %c0_i32, %c0_i32_0 : i32, i32
  }
  func.func @transform_2(%arg0: i32, %arg1: i32) -> (i32, i32) {
    %c0_i32 = arith.constant 0 : i32
    %c0_i32_0 = arith.constant 0 : i32
    %c0_i32_1 = arith.constant 0 : i32
    return %c0_i32, %c0_i32_0 : i32, i32
  }
  func.func @transform_3(%arg0: i32, %arg1: i32) -> (i32, i32) {
    %c0_i32 = arith.constant 0 : i32
    %c0_i32_0 = arith.constant 0 : i32
    %c0_i32_1 = arith.constant 0 : i32
    return %c0_i32, %c0_i32_0 : i32, i32
  }
  func.func @transform_4(%arg0: i32, %arg1: i32) -> (i32, i32) {
    %c0_i32 = arith.constant 0 : i32
    %c0_i32_0 = arith.constant 0 : i32
    %c0_i32_1 = arith.constant 0 : i32
    return %c0_i32, %c0_i32_0 : i32, i32
  }
  func.func @transform_5(%arg0: i32, %arg1: i32) -> (i32, i32) {
    %c0_i32 = arith.constant 0 : i32
    %c0_i32_0 = arith.constant 0 : i32
    %c0_i32_1 = arith.constant 0 : i32
    return %c0_i32, %c0_i32_0 : i32, i32
  }
  func.func @transform_6(%arg0: i32, %arg1: i32) -> (i32, i32, i32, i32) {
    %c0_i32 = arith.constant 0 : i32
    %c0_i32_0 = arith.constant 0 : i32
    %c0_i32_1 = arith.constant 0 : i32
    return %arg0, %c0_i32, %arg1, %c0_i32_0 : i32, i32, i32, i32
  }
}

</mosaic_0001>

<llo_original>
// kernel: tpu_custom_call.1
$region0: #{tpu_custom_call.1}
  #allocation0 [shape = 'u32[]', space=smem, size = 0x4, offset = 0x4, fixed_abs, tag = 'smem constant byte address 0x4 - core index']
  #allocation1 [shape = 'u32[72,128]{1,0:T(1,128)}', space=vmem, size = 0x9000, scoped, tag = 'internal scratch']
  %s0 = inlined_call_operand.hbm [shape: f32[2,4,16,16], index: 0, kind: input, shape index: {}]
  %s1 = inlined_call_operand.vmem [shape: f32[16,4], index: 1, kind: input, shape index: {}]
  %s2 = inlined_call_operand.vmem [shape: f32[16,4], index: 2, kind: input, shape index: {}]
  %s3 = inlined_call_operand.vmem [shape: f32[16,8], index: 3, kind: input, shape index: {}]
  %s4 = inlined_call_operand.vmem [shape: f32[16,8], index: 4, kind: input, shape index: {}]
  %s5 = inlined_call_operand.vmem [shape: f32[8,1], index: 5, kind: input, shape index: {}]
  %s6 = inlined_call_operand.hbm [shape: f32[2,8,8,8], index: 6, kind: output, shape index: {}]
  %s7 = sld [smem:[#allocation0]]
  $region61: #{tpu_custom_call.1} parent=0
    _
  %s9 = ssub.s32 1, %s7
  %s10 = scalar_select 0, %s9, %s7
  $region1: #{tpu_custom_call.1} parent=0
    #allocation2 [shape = 'u8[65536]{0}', space=vmem, size = 0x10000, scoped, tag = 'input window, operand 0']
    #allocation3 [shape = 's32[2]{0}', space=sflag, size = 0x8, scoped, tag = 'scoped memory for tpu_custom_call.1']
    #allocation4 [shape = 's32[2]{0}', space=sflag, size = 0x8, scoped, tag = 'scoped memory for tpu_custom_call.1']
    #allocation5 [shape = 'u8[65536]{0}', space=vmem, size = 0x10000, scoped, tag = 'output window, operand 0']
    %11 = vsyncpa [#allocation3], 0
    %s12 = scalar_lea.sflag [#allocation3], 1
    %13 = vsyncpa %s12, 0
    %14 = vsyncpa [#allocation4], 0
    %s15 = scalar_lea.sflag [#allocation4], 1
    %16 = vsyncpa %s15, 0
    loop: start=0, step=1, limit=4
    $region2: #{tpu_custom_call.1} parent=1 // loop_pre_header
      _
    $region3: #{tpu_custom_call.1} parent=1 // loop_header
      %s18 = sphi 0, %s22
      %p19 = scmp.ge.s32.totalorder %s18, 4
      %s25 = sphi 0, %s37
      %s26 = sphi 0, %s33
      %s27 = sphi 0, %s25
      %s28 = sphi 0, %s26
      %s29 = sphi 0, %s27
      %s30 = sphi 0, %s28
      %s42 = sphi 0, %s44
      %s45 = sphi 0, %s42
      %s46 = sphi 0, %s45
      %s62 = sphi 0, %s46
      %s66 = sphi 0, %s66
      %s68 = sphi 0, %s66
      %s69 = sphi 0, %s68
      %s83 = sphi 0, %s69
      %s87 = sphi 0, %s87
      %s89 = sphi 0, %s87
      %s90 = sphi 0, %s89
      %s104 = sphi 0, %s90
      %s108 = sphi 0, %s108
      %s110 = sphi 0, %s108
      %s111 = sphi 0, %s110
      %s125 = sphi 0, %s111
      %s129 = sphi 0, %s129
      %s131 = sphi 0, %s129
      %s132 = sphi 0, %s131
      %s146 = sphi 0, %s132
      %s150 = sphi 0, %s150
      %s152 = sphi 0, %s150
      %s153 = sphi 0, %s152
      %s167 = sphi 0, %s153
      %s175 = sphi 0, %s177
      %s178 = sphi 0, %s175
      %s179 = sphi 0, %s178
      %s195 = sphi 0, %s179
    $region4: #{tpu_custom_call.1} parent=1 // loop_header_branch
      %21 = sbr.rel (%p19) target = $region8
    $region5: #{tpu_custom_call.1} parent=1 // loop_body
      %s23 = ssub.s32 %s18, 1
      %s24 = ssub.s32 %s18, 2
      %s31 = sadd.s32 1, %s26
      %p32 = scmp.ge.s32.totalorder %s31, 1
      %s33 = scalar_select %p32, 0, %s31
      %s34 = sadd.s32 1, %s25
      %s35 = scalar_select %p32, %s34, %s25
      %p36 = scmp.ge.s32.totalorder %s35, 2
      %s37 = scalar_select %p36, 0, %s35
      %s38 = ssub.s32 %s25, %s37
      %s39 = ssub.s32 %s26, %s33
      %s40 = sor.u32 %s38, %s39
      %p41 = scmp.eq.s32.totalorder %s40, 0
      %s43 = sadd.s32 %s42, 1
      %s44 = scalar_select %p41, %s42, %s43
      %p47 = pneg %p41
      %p48 = scmp.eq.s32.totalorder %s18, 1
      %p49 = por %p47, %p48
      %p50 = scmp.ne.s32.totalorder %s42, %s45
      %p51 = scmp.eq.s32.totalorder %s18, 0
      %p52 = por %p50, %p51
      %p53 = scmp.ne.s32.totalorder %s42, %s45
      %p54 = scmp.eq.s32.totalorder %s23, 1
      %p55 = por %p53, %p54
      %p56 = scmp.ne.s32.totalorder %s45, %s46
      %p57 = scmp.eq.s32.totalorder %s23, 0
      %p58 = por %p56, %p57
      %p59 = scmp.ne.s32.totalorder %s45, %s46
      %p60 = scmp.eq.s32.totalorder %s24, 1
      %p61 = por %p59, %p60
      %p63 = scmp.ne.s32.totalorder %s46, %s62
      %p64 = scmp.eq.s32.totalorder %s24, 0
      %p65 = por %p63, %p64
      %s67 = sadd.s32 %s66, 1
      %p70 = scmp.eq.s32.totalorder %s18, 1
      %p71 = scmp.ne.s32.totalorder %s66, %s68
      %p72 = scmp.eq.s32.totalorder %s18, 0
      %p73 = por %p71, %p72
      %p74 = scmp.ne.s32.totalorder %s66, %s68
      %p75 = scmp.eq.s32.totalorder %s23, 1
      %p76 = por %p74, %p75
      %p77 = scmp.ne.s32.totalorder %s68, %s69
      %p78 = scmp.eq.s32.totalorder %s23, 0
      %p79 = por %p77, %p78
      %p80 = scmp.ne.s32.totalorder %s68, %s69
      %p81 = scmp.eq.s32.totalorder %s24, 1
      %p82 = por %p80, %p81
      %p84 = scmp.ne.s32.totalorder %s69, %s83
      %p85 = scmp.eq.s32.totalorder %s24, 0
      %p86 = por %p84, %p85
      %s88 = sadd.s32 %s87, 1
      %p91 = scmp.eq.s32.totalorder %s18, 1
      %p92 = scmp.ne.s32.totalorder %s87, %s89
      %p93 = scmp.eq.s32.totalorder %s18, 0
      %p94 = por %p92, %p93
      %p95 = scmp.ne.s32.totalorder %s87, %s89
      %p96 = scmp.eq.s32.totalorder %s23, 1
      %p97 = por %p95, %p96
      %p98 = scmp.ne.s32.totalorder %s89, %s90
      %p99 = scmp.eq.s32.totalorder %s23, 0
      %p100 = por %p98, %p99
      %p101 = scmp.ne.s32.totalorder %s89, %s90
      %p102 = scmp.eq.s32.totalorder %s24, 1
      %p103 = por %p101, %p102
      %p105 = scmp.ne.s32.totalorder %s90, %s104
      %p106 = scmp.eq.s32.totalorder %s24, 0
      %p107 = por %p105, %p106
      %s109 = sadd.s32 %s108, 1
      %p112 = scmp.eq.s32.totalorder %s18, 1
      %p113 = scmp.ne.s32.totalorder %s108, %s110
      %p114 = scmp.eq.s32.totalorder %s18, 0
      %p115 = por %p113, %p114
      %p116 = scmp.ne.s32.totalorder %s108, %s110
      %p117 = scmp.eq.s32.totalorder %s23, 1
      %p118 = por %p116, %p117
      %p119 = scmp.ne.s32.totalorder %s110, %s111
      %p120 = scmp.eq.s32.totalorder %s23, 0
      %p121 = por %p119, %p120
      %p122 = scmp.ne.s32.totalorder %s110, %s111
      %p123 = scmp.eq.s32.totalorder %s24, 1
      %p124 = por %p122, %p123
      %p126 = scmp.ne.s32.totalorder %s111, %s125
      %p127 = scmp.eq.s32.totalorder %s24, 0
      %p128 = por %p126, %p127
      %s130 = sadd.s32 %s129, 1
      %p133 = scmp.eq.s32.totalorder %s18, 1
      %p134 = scmp.ne.s32.totalorder %s129, %s131
      %p135 = scmp.eq.s32.totalorder %s18, 0
      %p136 = por %p134, %p135
      %p137 = scmp.ne.s32.totalorder %s129, %s131
      %p138 = scmp.eq.s32.totalorder %s23, 1
      %p139 = por %p137, %p138
      %p140 = scmp.ne.s32.totalorder %s131, %s132
      %p141 = scmp.eq.s32.totalorder %s23, 0
      %p142 = por %p140, %p141
      %p143 = scmp.ne.s32.totalorder %s131, %s132
      %p144 = scmp.eq.s32.totalorder %s24, 1
      %p145 = por %p143, %p144
      %p147 = scmp.ne.s32.totalorder %s132, %s146
      %p148 = scmp.eq.s32.totalorder %s24, 0
      %p149 = por %p147, %p148
      %s151 = sadd.s32 %s150, 1
      %p154 = scmp.eq.s32.totalorder %s18, 1
      %p155 = scmp.ne.s32.totalorder %s150, %s152
      %p156 = scmp.eq.s32.totalorder %s18, 0
      %p157 = por %p155, %p156
      %p158 = scmp.ne.s32.totalorder %s150, %s152
      %p159 = scmp.eq.s32.totalorder %s23, 1
      %p160 = por %p158, %p159
      %p161 = scmp.ne.s32.totalorder %s152, %s153
      %p162 = scmp.eq.s32.totalorder %s23, 0
      %p163 = por %p161, %p162
      %p164 = scmp.ne.s32.totalorder %s152, %s153
      %p165 = scmp.eq.s32.totalorder %s24, 1
      %p166 = por %p164, %p165
      %p168 = scmp.ne.s32.totalorder %s153, %s167
      %p169 = scmp.eq.s32.totalorder %s24, 0
      %p170 = por %p168, %p169
      %s171 = ssub.s32 %s25, %s37
      %s172 = ssub.s32 %s26, %s33
      %s173 = sor.u32 %s171, %s172
      %p174 = scmp.eq.s32.totalorder %s173, 0
      %s176 = sadd.s32 %s175, 1
      %s177 = scalar_select %p174, %s175, %s176
      %p180 = pneg %p174
      %p181 = scmp.eq.s32.totalorder %s18, 1
      %p182 = por %p180, %p181
      %p183 = scmp.ne.s32.totalorder %s175, %s178
      %p184 = scmp.eq.s32.totalorder %s18, 0
      %p185 = por %p183, %p184
      %p186 = scmp.ne.s32.totalorder %s175, %s178
      %p187 = scmp.eq.s32.totalorder %s23, 1
      %p188 = por %p186, %p187
      %p189 = scmp.ne.s32.totalorder %s178, %s179
      %p190 = scmp.eq.s32.totalorder %s23, 0
      %p191 = por %p189, %p190
      %p192 = scmp.ne.s32.totalorder %s178, %s179
      %p193 = scmp.eq.s32.totalorder %s24, 1
      %p194 = por %p192, %p193
      %p196 = scmp.ne.s32.totalorder %s179, %s195
      %p197 = scmp.eq.s32.totalorder %s24, 0
      %p198 = por %p196, %p197
      %p199 = scmp.le.s32.totalorder 1, %s18
      %p200 = scmp.lt.s32.totalorder %s18, 3
      %p201 = pnand %p199, %p200
      %p202 = pneg %p201
      // Predicated region
      $region9: #{tpu_custom_call.1} parent=5 // pred_check
        _
      $region10: #{tpu_custom_call.1} parent=5 // pred_check_branch
        %204 = sbr.rel (%p201) target = $region12
      $region11: #{tpu_custom_call.1} parent=5 // pred_region
        %s205 = ssub.s32 %s18, 1
        // Predicated region
        $region13: #{tpu_custom_call.1} parent=11 // pred_check
          %p206 = pneg %p79
        $region14: #{tpu_custom_call.1} parent=11 // pred_check_branch
          %208 = sbr.rel (%p206) target = $region16
        $region15: #{tpu_custom_call.1} parent=11 // pred_region
          _
        $region16: #{tpu_custom_call.1} parent=11 // pred_fallthru
          _
        // Predicated region
        $region17: #{tpu_custom_call.1} parent=11 // pred_check
          %p209 = pneg %p100
        $region18: #{tpu_custom_call.1} parent=11 // pred_check_branch
          %211 = sbr.rel (%p209) target = $region20
        $region19: #{tpu_custom_call.1} parent=11 // pred_region
          _
        $region20: #{tpu_custom_call.1} parent=11 // pred_fallthru
          _
        // Predicated region
        $region21: #{tpu_custom_call.1} parent=11 // pred_check
          %p212 = pneg %p121
        $region22: #{tpu_custom_call.1} parent=11 // pred_check_branch
          %214 = sbr.rel (%p212) target = $region24
        $region23: #{tpu_custom_call.1} parent=11 // pred_region
          _
        $region24: #{tpu_custom_call.1} parent=11 // pred_fallthru
          _
        // Predicated region
        $region25: #{tpu_custom_call.1} parent=11 // pred_check
          %p215 = pneg %p142
        $region26: #{tpu_custom_call.1} parent=11 // pred_check_branch
          %217 = sbr.rel (%p215) target = $region28
        $region27: #{tpu_custom_call.1} parent=11 // pred_region
          _
        $region28: #{tpu_custom_call.1} parent=11 // pred_fallthru
          _
        // Predicated region
        $region29: #{tpu_custom_call.1} parent=11 // pred_check
          %p218 = pneg %p163
        $region30: #{tpu_custom_call.1} parent=11 // pred_check_branch
          %220 = sbr.rel (%p218) target = $region32
        $region31: #{tpu_custom_call.1} parent=11 // pred_region
          _
        $region32: #{tpu_custom_call.1} parent=11 // pred_fallthru
          _
      $region12: #{tpu_custom_call.1} parent=5 // pred_fallthru
        _
      %p221 = scmp.lt.s32.totalorder %s18, 2
      // Predicated region
      $region33: #{tpu_custom_call.1} parent=5 // pred_check
        %p222 = pneg %p221
      $region34: #{tpu_custom_call.1} parent=5 // pred_check_branch
        %224 = sbr.rel (%p222) target = $region36
      $region35: #{tpu_custom_call.1} parent=5 // pred_region
        // Predicated region
        $region37: #{tpu_custom_call.1} parent=35 // pred_check
          %p225 = pneg %p52
        $region38: #{tpu_custom_call.1} parent=35 // pred_check_branch
          %227 = sbr.rel (%p225) target = $region40
        $region39: #{tpu_custom_call.1} parent=35 // pred_region
          %s228 = sand.u32 %s42, 1
          %s229 = scalar_lea.sflag [#allocation3], %s228
          %s230 = sand.u32 %s42, 1
          %s231 = smul.addr %s230, 64
          %s232 = scalar_lea.vmem [#allocation2], %s231
          %s233 = smul.u32 2, %s26
          %235 = vsyncadd %s229, 0
          %s236 = smul.addr %s25, 8
          %s237 = sadd.s32 %s233, %s236
          %s238 = smul.addr %s237, 8
          %s239 = scalar_lea.hbm %s0, %s238
          %s240 = sshll.u32 %s239, 4
          %s241 = int_to_ptr.hbm [resolvable:$true] %s240
          %s242 = sshll.u32 %s232, 4
          %s243 = int_to_ptr.vmem [resolvable:$true] %s242
          %248 = dma.hbm_to_vmem [thread:$0]  %s241, 1024, %s243, %s229, 128, 128, 8
        $region40: #{tpu_custom_call.1} parent=35 // pred_fallthru
          _
      $region36: #{tpu_custom_call.1} parent=5 // pred_fallthru
        _
      %p249 = scmp.le.s32.totalorder 1, %s18
      %p250 = scmp.lt.s32.totalorder %s18, 3
      %p251 = pnand %p249, %p250
      %p252 = pneg %p251
      // Predicated region
      $region41: #{tpu_custom_call.1} parent=5 // pred_check
        _
      $region42: #{tpu_custom_call.1} parent=5 // pred_check_branch
        %254 = sbr.rel (%p251) target = $region44
      $region43: #{tpu_custom_call.1} parent=5 // pred_region
        %s255 = ssub.s32 %s18, 1
        %s256 = sand.u32 %s45, 1
        %s257 = scalar_lea.sflag [#allocation3], %s256
        %s258 = sand.u32 %s45, 1
        %s259 = smul.addr %s258, 64
        %s260 = scalar_lea.vmem [#allocation2], %s259
        // Predicated region
        $region45: #{tpu_custom_call.1} parent=43 // pred_check
          %p261 = pneg %p58
        $region46: #{tpu_custom_call.1} parent=43 // pred_check_branch
          %263 = sbr.rel (%p261) target = $region48
        $region47: #{tpu_custom_call.1} parent=43 // pred_region
          %265 = dma.done %s257, 1024
        $region48: #{tpu_custom_call.1} parent=43 // pred_fallthru
          _
        %s266 = sand.u32 %s45, 1
        %s267 = scalar_lea.sflag [#allocation3], %s266
        %s268 = sand.u32 %s45, 1
        %s269 = smul.addr %s268, 64
        %s270 = scalar_lea.vmem [#allocation2], %s269
        %p271 = pneg %p58
        %p272 = pneg %p55
        %p273 = pneg %p79
        %p274 = pneg %p76
        %p275 = pneg %p100
        %p276 = pneg %p97
        %p277 = pneg %p121
        %p278 = pneg %p118
        %p279 = pneg %p142
        %p280 = pneg %p139
        %p281 = pneg %p163
        %p282 = pneg %p160
        %p283 = pneg %p191
        %p284 = pneg %p188
        %s285 = sand.u32 %s178, 1
        %s286 = scalar_lea.sflag [#allocation4], %s285
        %s287 = sand.u32 %s178, 1
        %s288 = smul.addr %s287, 64
        %s289 = scalar_lea.vmem [#allocation5], %s288
        %s290 = smul.u32 2, %s28
        %v291 = vld [vmem:[%s1] sm:$0xff]
        %v292 = vld [vmem:[%s1 + $0x8] sm:$0xff]
        %v293 = vld [vmem:[%s2] sm:$0xff]
        %v294 = vld [vmem:[%s2 + $0x8] sm:$0xff]
        %v295 = vld [vmem:[%s3] sm:$0xff]
        %v296 = vld [vmem:[%s3 + $0x8] sm:$0xff]
        %v297 = vld [vmem:[%s4] sm:$0xff]
        %v298 = vld [vmem:[%s4 + $0x8] sm:$0xff]
        %v299 = vld [vmem:[%s5] sm:$0xff]
        %v300 = vld [vmem:[%s260] sm:$0x1]
        %v301 = vld [vmem:[%s260 + $0x10] sm:$0x1]
        %v302 = vld [vmem:[%s260 + $0x20] sm:$0x1]
        %v303 = vld [vmem:[%s260 + $0x30] sm:$0x1]
        %v304 = vld [vmem:[%s260 + $0x1] sm:$0x1]
        %v305 = vld [vmem:[%s260 + $0x11] sm:$0x1]
        %v306 = vld [vmem:[%s260 + $0x21] sm:$0x1]
        %v307 = vld [vmem:[%s260 + $0x31] sm:$0x1]
        %v312 = vrot.slane %v305, 7
        %vm313 = vcmask 1041409
        %v314 = vsel %vm313, %v312, %v304
        %v315 = vrot.slane %v306, 6
        %vm316 = vcmask 1042434
        %v317 = vsel %vm316, %v315, %v314
        %v318 = vrot.slane %v307, 5
        %vm319 = vcmask 1043459
        %v320 = vsel %vm319, %v318, %v317
        %vm321 = vcmask 31744
        %v323 = vsel %vm321, %v293, 0
        %v326 = vsel %vm321, %v294, 0
        %vm328 = vcmask 1043456
        %v329 = vsel %vm328, %v320, 0
        %331 = vmatpush.msra.mxu0 0.0
        %332 = vmatpush.msra.mxu0 0.0
        %333 = vmatpush.msra.mxu0 0.0
        %334 = vmatpush.msra.mxu0 0.0
        %335 = vmatpush.msra.mxu0 0.0
        %336 = vmatpush.msra.mxu0 0.0
        %337 = vmatpush.msra.mxu0 0.0
        %338 = vmatpush.msra.mxu0 0.0
        %339 = vmatpush.msra.mxu0 0.0
        %340 = vmatpush.msra.mxu0 0.0
        %341 = vmatpush.msra.mxu0 0.0
        %342 = vmatpush.msra.mxu0 0.0
        %343 = vmatpush.msra.mxu0 0.0
        %344 = vmatpush.msra.mxu0 0.0
        %345 = vmatpush.msra.mxu0 0.0
        %346 = vmatpush.msra.mxu0 %v329
        %347 = vmatmul.f32.gmra.mxu0 %v323
        %v348 = vpop.f32.mrf.mxu0
        %v349 = vadd.f32 0.0, %v348
        %350 = vmatmul.f32.gmra.mxu0 %v326
        %v351 = vpop.f32.mrf.mxu0
        %v352 = vadd.f32 0.0, %v351
        %353 = vdwg.mxu0
        %v358 = vrot.slane %v301, 7
        %v359 = vsel %vm313, %v358, %v300
        %v360 = vrot.slane %v302, 6
        %v361 = vsel %vm316, %v360, %v359
        %v362 = vrot.slane %v303, 5
        %v363 = vsel %vm319, %v362, %v361
        %v365 = vsel %vm321, %v291, 0
        %v368 = vsel %vm321, %v292, 0
        %v370 = vsel %vm328, %v363, 0
        %372 = vmatpush.msra.mxu0 0.0
        %373 = vmatpush.msra.mxu0 0.0
        %374 = vmatpush.msra.mxu0 0.0
        %375 = vmatpush.msra.mxu0 0.0
        %376 = vmatpush.msra.mxu0 0.0
        %377 = vmatpush.msra.mxu0 0.0
        %378 = vmatpush.msra.mxu0 0.0
        %379 = vmatpush.msra.mxu0 0.0
        %380 = vmatpush.msra.mxu0 0.0
        %381 = vmatpush.msra.mxu0 0.0
        %382 = vmatpush.msra.mxu0 0.0
        %383 = vmatpush.msra.mxu0 0.0
        %384 = vmatpush.msra.mxu0 0.0
        %385 = vmatpush.msra.mxu0 0.0
        %386 = vmatpush.msra.mxu0 0.0
        %387 = vmatpush.msra.mxu0 %v370
        %388 = vmatmul.f32.gmra.mxu0 %v365
        %v389 = vpop.f32.mrf.mxu0
        %v390 = vadd.f32 %v349, %v389
        %391 = vmatmul.f32.gmra.mxu0 %v368
        %v392 = vpop.f32.mrf.mxu0
        %v393 = vadd.f32 %v352, %v392
        %394 = vdwg.mxu0
        %vm395 = vcmask 130048
        %v397 = vsel %vm395, %v393, 0
        %399 = vmatpush.msra.mxu0 0.0
        %400 = vmatpush.msra.mxu0 0.0
        %401 = vmatpush.msra.mxu0 0.0
        %402 = vmatpush.msra.mxu0 0.0
        %403 = vmatpush.msra.mxu0 0.0
        %404 = vmatpush.msra.mxu0 0.0
        %405 = vmatpush.msra.mxu0 0.0
        %406 = vmatpush.msra.mxu0 0.0
        %407 = vmatpush.msra.mxu0 0.0
        %408 = vmatpush.msra.mxu0 0.0
        %409 = vmatpush.msra.mxu0 0.0
        %410 = vmatpush.msra.mxu0 0.0
        %411 = vmatpush.msra.mxu0 0.0
        %412 = vmatpush.msra.mxu0 0.0
        %413 = vmatpush.msra.mxu0 %v298
        %414 = vmatpush.msra.mxu0 %v297
        %415 = vmatmul.f32.gmra.mxu0 %v397
        %v416 = vpop.f32.mrf.mxu0
        %v417 = vadd.f32 0.0, %v416
        %418 = vdwg.mxu0
        %v420 = vsel %vm395, %v390, 0
        %422 = vmatpush.msra.mxu0 0.0
        %423 = vmatpush.msra.mxu0 0.0
        %424 = vmatpush.msra.mxu0 0.0
        %425 = vmatpush.msra.mxu0 0.0
        %426 = vmatpush.msra.mxu0 0.0
        %427 = vmatpush.msra.mxu0 0.0
        %428 = vmatpush.msra.mxu0 0.0
        %429 = vmatpush.msra.mxu0 0.0
        %430 = vmatpush.msra.mxu0 0.0
        %431 = vmatpush.msra.mxu0 0.0
        %432 = vmatpush.msra.mxu0 0.0
        %433 = vmatpush.msra.mxu0 0.0
        %434 = vmatpush.msra.mxu0 0.0
        %435 = vmatpush.msra.mxu0 0.0
        %436 = vmatpush.msra.mxu0 %v296
        %437 = vmatpush.msra.mxu0 %v295
        %438 = vmatmul.f32.gmra.mxu0 %v420
        %v439 = vpop.f32.mrf.mxu0
        %v440 = vadd.f32 %v417, %v439
        %441 = vdwg.mxu0
        %443 = vset.pattern.permute.xlu0 0
        %444 = vperm.xlu0 %443, %v299
        %v445 = vpop.permute.xlu0 %444
        %v447 = vadd.f32 %v440, %v445
        %v448 = vmax.f32 %v447, 0.0
        %v450 = vrot.slane %v448, 1
        %v451 = vrot.slane %v448, 2
        %v452 = vrot.slane %v448, 3
        %v453 = vrot.slane %v448, 4
        %v454 = vrot.slane %v448, 5
        %v455 = vrot.slane %v448, 6
        %v456 = vrot.slane %v448, 7
        %vm464 = vcmask 57344
        %465 = vst.msk [vmem:[%s289] sm:$0x1] %vm464, %v448
        %466 = vst.msk [vmem:[%s289 + $0x8] sm:$0x1] %vm464, %v450
        %467 = vst.msk [vmem:[%s289 + $0x10] sm:$0x1] %vm464, %v451
        %468 = vst.msk [vmem:[%s289 + $0x18] sm:$0x1] %vm464, %v452
        %469 = vst.msk [vmem:[%s289 + $0x20] sm:$0x1] %vm464, %v453
        %470 = vst.msk [vmem:[%s289 + $0x28] sm:$0x1] %vm464, %v454
        %471 = vst.msk [vmem:[%s289 + $0x30] sm:$0x1] %vm464, %v455
        %472 = vst.msk [vmem:[%s289 + $0x38] sm:$0x1] %vm464, %v456
        %v473 = vld [vmem:[%s260 + $0x2] sm:$0x1]
        %v474 = vld [vmem:[%s260 + $0x12] sm:$0x1]
        %v475 = vld [vmem:[%s260 + $0x22] sm:$0x1]
        %v476 = vld [vmem:[%s260 + $0x32] sm:$0x1]
        %v477 = vld [vmem:[%s260 + $0x3] sm:$0x1]
        %v478 = vld [vmem:[%s260 + $0x13] sm:$0x1]
        %v479 = vld [vmem:[%s260 + $0x23] sm:$0x1]
        %v480 = vld [vmem:[%s260 + $0x33] sm:$0x1]
        %v485 = vrot.slane %v478, 7
        %v486 = vsel %vm313, %v485, %v477
        %v487 = vrot.slane %v479, 6
        %v488 = vsel %vm316, %v487, %v486
        %v489 = vrot.slane %v480, 5
        %v490 = vsel %vm319, %v489, %v488
        %v491 = vsel %vm328, %v490, 0
        %493 = vmatpush.msra.mxu0 0.0
        %494 = vmatpush.msra.mxu0 0.0
        %495 = vmatpush.msra.mxu0 0.0
        %496 = vmatpush.msra.mxu0 0.0
        %497 = vmatpush.msra.mxu0 0.0
        %498 = vmatpush.msra.mxu0 0.0
        %499 = vmatpush.msra.mxu0 0.0
        %500 = vmatpush.msra.mxu0 0.0
        %501 = vmatpush.msra.mxu0 0.0
        %502 = vmatpush.msra.mxu0 0.0
        %503 = vmatpush.msra.mxu0 0.0
        %504 = vmatpush.msra.mxu0 0.0
        %505 = vmatpush.msra.mxu0 0.0
        %506 = vmatpush.msra.mxu0 0.0
        %507 = vmatpush.msra.mxu0 0.0
        %508 = vmatpush.msra.mxu0 %v491
        %509 = vmatmul.f32.gmra.mxu0 %v323
        %v510 = vpop.f32.mrf.mxu0
        %v511 = vadd.f32 0.0, %v510
        %512 = vmatmul.f32.gmra.mxu0 %v326
        %v513 = vpop.f32.mrf.mxu0
        %v514 = vadd.f32 0.0, %v513
        %515 = vdwg.mxu0
        %v520 = vrot.slane %v474, 7
        %v521 = vsel %vm313, %v520, %v473
        %v522 = vrot.slane %v475, 6
        %v523 = vsel %vm316, %v522, %v521
        %v524 = vrot.slane %v476, 5
        %v525 = vsel %vm319, %v524, %v523
        %v526 = vsel %vm328, %v525, 0
        %528 = vmatpush.msra.mxu0 0.0
        %529 = vmatpush.msra.mxu0 0.0
        %530 = vmatpush.msra.mxu0 0.0
        %531 = vmatpush.msra.mxu0 0.0
        %532 = vmatpush.msra.mxu0 0.0
        %533 = vmatpush.msra.mxu0 0.0
        %534 = vmatpush.msra.mxu0 0.0
        %535 = vmatpush.msra.mxu0 0.0
        %536 = vmatpush.msra.mxu0 0.0
        %537 = vmatpush.msra.mxu0 0.0
        %538 = vmatpush.msra.mxu0 0.0
        %539 = vmatpush.msra.mxu0 0.0
        %540 = vmatpush.msra.mxu0 0.0
        %541 = vmatpush.msra.mxu0 0.0
        %542 = vmatpush.msra.mxu0 0.0
        %543 = vmatpush.msra.mxu0 %v526
        %544 = vmatmul.f32.gmra.mxu0 %v365
        %v545 = vpop.f32.mrf.mxu0
        %v546 = vadd.f32 %v511, %v545
        %547 = vmatmul.f32.gmra.mxu0 %v368
        %v548 = vpop.f32.mrf.mxu0
        %v549 = vadd.f32 %v514, %v548
        %550 = vdwg.mxu0
        %v552 = vsel %vm395, %v549, 0
        %554 = vmatpush.msra.mxu0 0.0
        %555 = vmatpush.msra.mxu0 0.0
        %556 = vmatpush.msra.mxu0 0.0
        %557 = vmatpush.msra.mxu0 0.0
        %558 = vmatpush.msra.mxu0 0.0
        %559 = vmatpush.msra.mxu0 0.0
        %560 = vmatpush.msra.mxu0 0.0
        %561 = vmatpush.msra.mxu0 0.0
        %562 = vmatpush.msra.mxu0 0.0
        %563 = vmatpush.msra.mxu0 0.0
        %564 = vmatpush.msra.mxu0 0.0
        %565 = vmatpush.msra.mxu0 0.0
        %566 = vmatpush.msra.mxu0 0.0
        %567 = vmatpush.msra.mxu0 0.0
        %568 = vmatpush.msra.mxu0 %v298
        %569 = vmatpush.msra.mxu0 %v297
        %570 = vmatmul.f32.gmra.mxu0 %v552
        %v571 = vpop.f32.mrf.mxu0
        %v572 = vadd.f32 0.0, %v571
        %573 = vdwg.mxu0
        %v575 = vsel %vm395, %v546, 0
        %577 = vmatpush.msra.mxu0 0.0
        %578 = vmatpush.msra.mxu0 0.0
        %579 = vmatpush.msra.mxu0 0.0
        %580 = vmatpush.msra.mxu0 0.0
        %581 = vmatpush.msra.mxu0 0.0
        %582 = vmatpush.msra.mxu0 0.0
        %583 = vmatpush.msra.mxu0 0.0
        %584 = vmatpush.msra.mxu0 0.0
        %585 = vmatpush.msra.mxu0 0.0
        %586 = vmatpush.msra.mxu0 0.0
        %587 = vmatpush.msra.mxu0 0.0
        %588 = vmatpush.msra.mxu0 0.0
        %589 = vmatpush.msra.mxu0 0.0
        %590 = vmatpush.msra.mxu0 0.0
        %591 = vmatpush.msra.mxu0 %v296
        %592 = vmatpush.msra.mxu0 %v295
        %593 = vmatmul.f32.gmra.mxu0 %v575
        %v594 = vpop.f32.mrf.mxu0
        %v595 = vadd.f32 %v572, %v594
        %596 = vdwg.mxu0
        %v597 = vadd.f32 %v595, %v445
        %v598 = vmax.f32 %v597, 0.0
        %v600 = vrot.slane %v598, 1
        %v601 = vrot.slane %v598, 2
        %v602 = vrot.slane %v598, 3
        %v603 = vrot.slane %v598, 4
        %v604 = vrot.slane %v598, 5
        %v605 = vrot.slane %v598, 6
        %v606 = vrot.slane %v598, 7
        %614 = vst.msk [vmem:[%s289 + $0x1] sm:$0x1] %vm464, %v598
        %615 = vst.msk [vmem:[%s289 + $0x9] sm:$0x1] %vm464, %v600
        %616 = vst.msk [vmem:[%s289 + $0x11] sm:$0x1] %vm464, %v601
        %617 = vst.msk [vmem:[%s289 + $0x19] sm:$0x1] %vm464, %v602
        %618 = vst.msk [vmem:[%s289 + $0x21] sm:$0x1] %vm464, %v603
        %619 = vst.msk [vmem:[%s289 + $0x29] sm:$0x1] %vm464, %v604
        %620 = vst.msk [vmem:[%s289 + $0x31] sm:$0x1] %vm464, %v605
        %621 = vst.msk [vmem:[%s289 + $0x39] sm:$0x1] %vm464, %v606
        %v622 = vld [vmem:[%s260 + $0x4] sm:$0x1]
        %v623 = vld [vmem:[%s260 + $0x14] sm:$0x1]
        %v624 = vld [vmem:[%s260 + $0x24] sm:$0x1]
        %v625 = vld [vmem:[%s260 + $0x34] sm:$0x1]
        %v626 = vld [vmem:[%s260 + $0x5] sm:$0x1]
        %v627 = vld [vmem:[%s260 + $0x15] sm:$0x1]
        %v628 = vld [vmem:[%s260 + $0x25] sm:$0x1]
        %v629 = vld [vmem:[%s260 + $0x35] sm:$0x1]
        %v634 = vrot.slane %v627, 7
        %v635 = vsel %vm313, %v634, %v626
        %v636 = vrot.slane %v628, 6
        %v637 = vsel %vm316, %v636, %v635
        %v638 = vrot.slane %v629, 5
        %v639 = vsel %vm319, %v638, %v637
        %v640 = vsel %vm328, %v639, 0
        %642 = vmatpush.msra.mxu0 0.0
        %643 = vmatpush.msra.mxu0 0.0
        %644 = vmatpush.msra.mxu0 0.0
        %645 = vmatpush.msra.mxu0 0.0
        %646 = vmatpush.msra.mxu0 0.0
        %647 = vmatpush.msra.mxu0 0.0
        %648 = vmatpush.msra.mxu0 0.0
        %649 = vmatpush.msra.mxu0 0.0
        %650 = vmatpush.msra.mxu0 0.0
        %651 = vmatpush.msra.mxu0 0.0
        %652 = vmatpush.msra.mxu0 0.0
        %653 = vmatpush.msra.mxu0 0.0
        %654 = vmatpush.msra.mxu0 0.0
        %655 = vmatpush.msra.mxu0 0.0
        %656 = vmatpush.msra.mxu0 0.0
        %657 = vmatpush.msra.mxu0 %v640
        %658 = vmatmul.f32.gmra.mxu0 %v323
        %v659 = vpop.f32.mrf.mxu0
        %v660 = vadd.f32 0.0, %v659
        %661 = vmatmul.f32.gmra.mxu0 %v326
        %v662 = vpop.f32.mrf.mxu0
        %v663 = vadd.f32 0.0, %v662
        %664 = vdwg.mxu0
        %v669 = vrot.slane %v623, 7
        %v670 = vsel %vm313, %v669, %v622
        %v671 = vrot.slane %v624, 6
        %v672 = vsel %vm316, %v671, %v670
        %v673 = vrot.slane %v625, 5
        %v674 = vsel %vm319, %v673, %v672
        %v675 = vsel %vm328, %v674, 0
        %677 = vmatpush.msra.mxu0 0.0
        %678 = vmatpush.msra.mxu0 0.0
        %679 = vmatpush.msra.mxu0 0.0
        %680 = vmatpush.msra.mxu0 0.0
        %681 = vmatpush.msra.mxu0 0.0
        %682 = vmatpush.msra.mxu0 0.0
        %683 = vmatpush.msra.mxu0 0.0
        %684 = vmatpush.msra.mxu0 0.0
        %685 = vmatpush.msra.mxu0 0.0
        %686 = vmatpush.msra.mxu0 0.0
        %687 = vmatpush.msra.mxu0 0.0
        %688 = vmatpush.msra.mxu0 0.0
        %689 = vmatpush.msra.mxu0 0.0
        %690 = vmatpush.msra.mxu0 0.0
        %691 = vmatpush.msra.mxu0 0.0
        %692 = vmatpush.msra.mxu0 %v675
        %693 = vmatmul.f32.gmra.mxu0 %v365
        %v694 = vpop.f32.mrf.mxu0
        %v695 = vadd.f32 %v660, %v694
        %696 = vmatmul.f32.gmra.mxu0 %v368
        %v697 = vpop.f32.mrf.mxu0
        %v698 = vadd.f32 %v663, %v697
        %699 = vdwg.mxu0
        %v701 = vsel %vm395, %v698, 0
        %703 = vmatpush.msra.mxu0 0.0
        %704 = vmatpush.msra.mxu0 0.0
        %705 = vmatpush.msra.mxu0 0.0
        %706 = vmatpush.msra.mxu0 0.0
        %707 = vmatpush.msra.mxu0 0.0
        %708 = vmatpush.msra.mxu0 0.0
        %709 = vmatpush.msra.mxu0 0.0
        %710 = vmatpush.msra.mxu0 0.0
        %711 = vmatpush.msra.mxu0 0.0
        %712 = vmatpush.msra.mxu0 0.0
        %713 = vmatpush.msra.mxu0 0.0
        %714 = vmatpush.msra.mxu0 0.0
        %715 = vmatpush.msra.mxu0 0.0
        %716 = vmatpush.msra.mxu0 0.0
        %717 = vmatpush.msra.mxu0 %v298
        %718 = vmatpush.msra.mxu0 %v297
        %719 = vmatmul.f32.gmra.mxu0 %v701
        %v720 = vpop.f32.mrf.mxu0
        %v721 = vadd.f32 0.0, %v720
        %722 = vdwg.mxu0
        %v724 = vsel %vm395, %v695, 0
        %726 = vmatpush.msra.mxu0 0.0
        %727 = vmatpush.msra.mxu0 0.0
        %728 = vmatpush.msra.mxu0 0.0
        %729 = vmatpush.msra.mxu0 0.0
        %730 = vmatpush.msra.mxu0 0.0
        %731 = vmatpush.msra.mxu0 0.0
        %732 = vmatpush.msra.mxu0 0.0
        %733 = vmatpush.msra.mxu0 0.0
        %734 = vmatpush.msra.mxu0 0.0
        %735 = vmatpush.msra.mxu0 0.0
        %736 = vmatpush.msra.mxu0 0.0
        %737 = vmatpush.msra.mxu0 0.0
        %738 = vmatpush.msra.mxu0 0.0
        %739 = vmatpush.msra.mxu0 0.0
        %740 = vmatpush.msra.mxu0 %v296
        %741 = vmatpush.msra.mxu0 %v295
        %742 = vmatmul.f32.gmra.mxu0 %v724
        %v743 = vpop.f32.mrf.mxu0
        %v744 = vadd.f32 %v721, %v743
        %745 = vdwg.mxu0
        %v746 = vadd.f32 %v744, %v445
        %v747 = vmax.f32 %v746, 0.0
        %v749 = vrot.slane %v747, 1
        %v750 = vrot.slane %v747, 2
        %v751 = vrot.slane %v747, 3
        %v752 = vrot.slane %v747, 4
        %v753 = vrot.slane %v747, 5
        %v754 = vrot.slane %v747, 6
        %v755 = vrot.slane %v747, 7
        %763 = vst.msk [vmem:[%s289 + $0x2] sm:$0x1] %vm464, %v747
        %764 = vst.msk [vmem:[%s289 + $0xa] sm:$0x1] %vm464, %v749
        %765 = vst.msk [vmem:[%s289 + $0x12] sm:$0x1] %vm464, %v750
        %766 = vst.msk [vmem:[%s289 + $0x1a] sm:$0x1] %vm464, %v751
        %767 = vst.msk [vmem:[%s289 + $0x22] sm:$0x1] %vm464, %v752
        %768 = vst.msk [vmem:[%s289 + $0x2a] sm:$0x1] %vm464, %v753
        %769 = vst.msk [vmem:[%s289 + $0x32] sm:$0x1] %vm464, %v754
        %770 = vst.msk [vmem:[%s289 + $0x3a] sm:$0x1] %vm464, %v755
        %v771 = vld [vmem:[%s260 + $0x6] sm:$0x1]
        %v772 = vld [vmem:[%s260 + $0x16] sm:$0x1]
        %v773 = vld [vmem:[%s260 + $0x26] sm:$0x1]
        %v774 = vld [vmem:[%s260 + $0x36] sm:$0x1]
        %v775 = vld [vmem:[%s260 + $0x7] sm:$0x1]
        %v776 = vld [vmem:[%s260 + $0x17] sm:$0x1]
        %v777 = vld [vmem:[%s260 + $0x27] sm:$0x1]
        %v778 = vld [vmem:[%s260 + $0x37] sm:$0x1]
        %v783 = vrot.slane %v776, 7
        %v784 = vsel %vm313, %v783, %v775
        %v785 = vrot.slane %v777, 6
        %v786 = vsel %vm316, %v785, %v784
        %v787 = vrot.slane %v778, 5
        %v788 = vsel %vm319, %v787, %v786
        %v789 = vsel %vm328, %v788, 0
        %791 = vmatpush.msra.mxu0 0.0
        %792 = vmatpush.msra.mxu0 0.0
        %793 = vmatpush.msra.mxu0 0.0
        %794 = vmatpush.msra.mxu0 0.0
        %795 = vmatpush.msra.mxu0 0.0
        %796 = vmatpush.msra.mxu0 0.0
        %797 = vmatpush.msra.mxu0 0.0
        %798 = vmatpush.msra.mxu0 0.0
        %799 = vmatpush.msra.mxu0 0.0
        %800 = vmatpush.msra.mxu0 0.0
        %801 = vmatpush.msra.mxu0 0.0
        %802 = vmatpush.msra.mxu0 0.0
        %803 = vmatpush.msra.mxu0 0.0
        %804 = vmatpush.msra.mxu0 0.0
        %805 = vmatpush.msra.mxu0 0.0
        %806 = vmatpush.msra.mxu0 %v789
        %807 = vmatmul.f32.gmra.mxu0 %v323
        %v808 = vpop.f32.mrf.mxu0
        %v809 = vadd.f32 0.0, %v808
        %810 = vmatmul.f32.gmra.mxu0 %v326
        %v811 = vpop.f32.mrf.mxu0
        %v812 = vadd.f32 0.0, %v811
        %813 = vdwg.mxu0
        %v818 = vrot.slane %v772, 7
        %v819 = vsel %vm313, %v818, %v771
        %v820 = vrot.slane %v773, 6
        %v821 = vsel %vm316, %v820, %v819
        %v822 = vrot.slane %v774, 5
        %v823 = vsel %vm319, %v822, %v821
        %v824 = vsel %vm328, %v823, 0
        %826 = vmatpush.msra.mxu0 0.0
        %827 = vmatpush.msra.mxu0 0.0
        %828 = vmatpush.msra.mxu0 0.0
        %829 = vmatpush.msra.mxu0 0.0
        %830 = vmatpush.msra.mxu0 0.0
        %831 = vmatpush.msra.mxu0 0.0
        %832 = vmatpush.msra.mxu0 0.0
        %833 = vmatpush.msra.mxu0 0.0
        %834 = vmatpush.msra.mxu0 0.0
        %835 = vmatpush.msra.mxu0 0.0
        %836 = vmatpush.msra.mxu0 0.0
        %837 = vmatpush.msra.mxu0 0.0
        %838 = vmatpush.msra.mxu0 0.0
        %839 = vmatpush.msra.mxu0 0.0
        %840 = vmatpush.msra.mxu0 0.0
        %841 = vmatpush.msra.mxu0 %v824
        %842 = vmatmul.f32.gmra.mxu0 %v365
        %v843 = vpop.f32.mrf.mxu0
        %v844 = vadd.f32 %v809, %v843
        %845 = vmatmul.f32.gmra.mxu0 %v368
        %v846 = vpop.f32.mrf.mxu0
        %v847 = vadd.f32 %v812, %v846
        %848 = vdwg.mxu0
        %v850 = vsel %vm395, %v847, 0
        %852 = vmatpush.msra.mxu0 0.0
        %853 = vmatpush.msra.mxu0 0.0
        %854 = vmatpush.msra.mxu0 0.0
        %855 = vmatpush.msra.mxu0 0.0
        %856 = vmatpush.msra.mxu0 0.0
        %857 = vmatpush.msra.mxu0 0.0
        %858 = vmatpush.msra.mxu0 0.0
        %859 = vmatpush.msra.mxu0 0.0
        %860 = vmatpush.msra.mxu0 0.0
        %861 = vmatpush.msra.mxu0 0.0
        %862 = vmatpush.msra.mxu0 0.0
        %863 = vmatpush.msra.mxu0 0.0
        %864 = vmatpush.msra.mxu0 0.0
        %865 = vmatpush.msra.mxu0 0.0
        %866 = vmatpush.msra.mxu0 %v298
        %867 = vmatpush.msra.mxu0 %v297
        %868 = vmatmul.f32.gmra.mxu0 %v850
        %v869 = vpop.f32.mrf.mxu0
        %v870 = vadd.f32 0.0, %v869
        %871 = vdwg.mxu0
        %v873 = vsel %vm395, %v844, 0
        %875 = vmatpush.msra.mxu0 0.0
        %876 = vmatpush.msra.mxu0 0.0
        %877 = vmatpush.msra.mxu0 0.0
        %878 = vmatpush.msra.mxu0 0.0
        %879 = vmatpush.msra.mxu0 0.0
        %880 = vmatpush.msra.mxu0 0.0
        %881 = vmatpush.msra.mxu0 0.0
        %882 = vmatpush.msra.mxu0 0.0
        %883 = vmatpush.msra.mxu0 0.0
        %884 = vmatpush.msra.mxu0 0.0
        %885 = vmatpush.msra.mxu0 0.0
        %886 = vmatpush.msra.mxu0 0.0
        %887 = vmatpush.msra.mxu0 0.0
        %888 = vmatpush.msra.mxu0 0.0
        %889 = vmatpush.msra.mxu0 %v296
        %890 = vmatpush.msra.mxu0 %v295
        %891 = vmatmul.f32.gmra.mxu0 %v873
        %v892 = vpop.f32.mrf.mxu0
        %v893 = vadd.f32 %v870, %v892
        %894 = vdwg.mxu0
        %v895 = vadd.f32 %v893, %v445
        %v896 = vmax.f32 %v895, 0.0
        %v898 = vrot.slane %v896, 1
        %v899 = vrot.slane %v896, 2
        %v900 = vrot.slane %v896, 3
        %v901 = vrot.slane %v896, 4
        %v902 = vrot.slane %v896, 5
        %v903 = vrot.slane %v896, 6
        %v904 = vrot.slane %v896, 7
        %912 = vst.msk [vmem:[%s289 + $0x3] sm:$0x1] %vm464, %v896
        %913 = vst.msk [vmem:[%s289 + $0xb] sm:$0x1] %vm464, %v898
        %914 = vst.msk [vmem:[%s289 + $0x13] sm:$0x1] %vm464, %v899
        %915 = vst.msk [vmem:[%s289 + $0x1b] sm:$0x1] %vm464, %v900
        %916 = vst.msk [vmem:[%s289 + $0x23] sm:$0x1] %vm464, %v901
        %917 = vst.msk [vmem:[%s289 + $0x2b] sm:$0x1] %vm464, %v902
        %918 = vst.msk [vmem:[%s289 + $0x33] sm:$0x1] %vm464, %v903
        %919 = vst.msk [vmem:[%s289 + $0x3b] sm:$0x1] %vm464, %v904
        %v920 = vld [vmem:[%s260 + $0x8] sm:$0x1]
        %v921 = vld [vmem:[%s260 + $0x18] sm:$0x1]
        %v922 = vld [vmem:[%s260 + $0x28] sm:$0x1]
        %v923 = vld [vmem:[%s260 + $0x38] sm:$0x1]
        %v924 = vld [vmem:[%s260 + $0x9] sm:$0x1]
        %v925 = vld [vmem:[%s260 + $0x19] sm:$0x1]
        %v926 = vld [vmem:[%s260 + $0x29] sm:$0x1]
        %v927 = vld [vmem:[%s260 + $0x39] sm:$0x1]
        %v932 = vrot.slane %v925, 7
        %v933 = vsel %vm313, %v932, %v924
        %v934 = vrot.slane %v926, 6
        %v935 = vsel %vm316, %v934, %v933
        %v936 = vrot.slane %v927, 5
        %v937 = vsel %vm319, %v936, %v935
        %v938 = vsel %vm328, %v937, 0
        %940 = vmatpush.msra.mxu0 0.0
        %941 = vmatpush.msra.mxu0 0.0
        %942 = vmatpush.msra.mxu0 0.0
        %943 = vmatpush.msra.mxu0 0.0
        %944 = vmatpush.msra.mxu0 0.0
        %945 = vmatpush.msra.mxu0 0.0
        %946 = vmatpush.msra.mxu0 0.0
        %947 = vmatpush.msra.mxu0 0.0
        %948 = vmatpush.msra.mxu0 0.0
        %949 = vmatpush.msra.mxu0 0.0
        %950 = vmatpush.msra.mxu0 0.0
        %951 = vmatpush.msra.mxu0 0.0
        %952 = vmatpush.msra.mxu0 0.0
        %953 = vmatpush.msra.mxu0 0.0
        %954 = vmatpush.msra.mxu0 0.0
        %955 = vmatpush.msra.mxu0 %v938
        %956 = vmatmul.f32.gmra.mxu0 %v323
        %v957 = vpop.f32.mrf.mxu0
        %v958 = vadd.f32 0.0, %v957
        %959 = vmatmul.f32.gmra.mxu0 %v326
        %v960 = vpop.f32.mrf.mxu0
        %v961 = vadd.f32 0.0, %v960
        %962 = vdwg.mxu0
        %v967 = vrot.slane %v921, 7
        %v968 = vsel %vm313, %v967, %v920
        %v969 = vrot.slane %v922, 6
        %v970 = vsel %vm316, %v969, %v968
        %v971 = vrot.slane %v923, 5
        %v972 = vsel %vm319, %v971, %v970
        %v973 = vsel %vm328, %v972, 0
        %975 = vmatpush.msra.mxu0 0.0
        %976 = vmatpush.msra.mxu0 0.0
        %977 = vmatpush.msra.mxu0 0.0
        %978 = vmatpush.msra.mxu0 0.0
        %979 = vmatpush.msra.mxu0 0.0
        %980 = vmatpush.msra.mxu0 0.0
        %981 = vmatpush.msra.mxu0 0.0
        %982 = vmatpush.msra.mxu0 0.0
        %983 = vmatpush.msra.mxu0 0.0
        %984 = vmatpush.msra.mxu0 0.0
        %985 = vmatpush.msra.mxu0 0.0
        %986 = vmatpush.msra.mxu0 0.0
        %987 = vmatpush.msra.mxu0 0.0
        %988 = vmatpush.msra.mxu0 0.0
        %989 = vmatpush.msra.mxu0 0.0
        %990 = vmatpush.msra.mxu0 %v973
        %991 = vmatmul.f32.gmra.mxu0 %v365
        %v992 = vpop.f32.mrf.mxu0
        %v993 = vadd.f32 %v958, %v992
        %994 = vmatmul.f32.gmra.mxu0 %v368
        %v995 = vpop.f32.mrf.mxu0
        %v996 = vadd.f32 %v961, %v995
        %997 = vdwg.mxu0
        %v999 = vsel %vm395, %v996, 0
        %1001 = vmatpush.msra.mxu0 0.0
        %1002 = vmatpush.msra.mxu0 0.0
        %1003 = vmatpush.msra.mxu0 0.0
        %1004 = vmatpush.msra.mxu0 0.0
        %1005 = vmatpush.msra.mxu0 0.0
        %1006 = vmatpush.msra.mxu0 0.0
        %1007 = vmatpush.msra.mxu0 0.0
        %1008 = vmatpush.msra.mxu0 0.0
        %1009 = vmatpush.msra.mxu0 0.0
        %1010 = vmatpush.msra.mxu0 0.0
        %1011 = vmatpush.msra.mxu0 0.0
        %1012 = vmatpush.msra.mxu0 0.0
        %1013 = vmatpush.msra.mxu0 0.0
        %1014 = vmatpush.msra.mxu0 0.0
        %1015 = vmatpush.msra.mxu0 %v298
        %1016 = vmatpush.msra.mxu0 %v297
        %1017 = vmatmul.f32.gmra.mxu0 %v999
        %v1018 = vpop.f32.mrf.mxu0
        %v1019 = vadd.f32 0.0, %v1018
        %1020 = vdwg.mxu0
        %v1022 = vsel %vm395, %v993, 0
        %1024 = vmatpush.msra.mxu0 0.0
        %1025 = vmatpush.msra.mxu0 0.0
        %1026 = vmatpush.msra.mxu0 0.0
        %1027 = vmatpush.msra.mxu0 0.0
        %1028 = vmatpush.msra.mxu0 0.0
        %1029 = vmatpush.msra.mxu0 0.0
        %1030 = vmatpush.msra.mxu0 0.0
        %1031 = vmatpush.msra.mxu0 0.0
        %1032 = vmatpush.msra.mxu0 0.0
        %1033 = vmatpush.msra.mxu0 0.0
        %1034 = vmatpush.msra.mxu0 0.0
        %1035 = vmatpush.msra.mxu0 0.0
        %1036 = vmatpush.msra.mxu0 0.0
        %1037 = vmatpush.msra.mxu0 0.0
        %1038 = vmatpush.msra.mxu0 %v296
        %1039 = vmatpush.msra.mxu0 %v295
        %1040 = vmatmul.f32.gmra.mxu0 %v1022
        %v1041 = vpop.f32.mrf.mxu0
        %v1042 = vadd.f32 %v1019, %v1041
        %1043 = vdwg.mxu0
        %v1044 = vadd.f32 %v1042, %v445
        %v1045 = vmax.f32 %v1044, 0.0
        %v1047 = vrot.slane %v1045, 1
        %v1048 = vrot.slane %v1045, 2
        %v1049 = vrot.slane %v1045, 3
        %v1050 = vrot.slane %v1045, 4
        %v1051 = vrot.slane %v1045, 5
        %v1052 = vrot.slane %v1045, 6
        %v1053 = vrot.slane %v1045, 7
        %1061 = vst.msk [vmem:[%s289 + $0x4] sm:$0x1] %vm464, %v1045
        %1062 = vst.msk [vmem:[%s289 + $0xc] sm:$0x1] %vm464, %v1047
        %1063 = vst.msk [vmem:[%s289 + $0x14] sm:$0x1] %vm464, %v1048
        %1064 = vst.msk [vmem:[%s289 + $0x1c] sm:$0x1] %vm464, %v1049
        %1065 = vst.msk [vmem:[%s289 + $0x24] sm:$0x1] %vm464, %v1050
        %1066 = vst.msk [vmem:[%s289 + $0x2c] sm:$0x1] %vm464, %v1051
        %1067 = vst.msk [vmem:[%s289 + $0x34] sm:$0x1] %vm464, %v1052
        %1068 = vst.msk [vmem:[%s289 + $0x3c] sm:$0x1] %vm464, %v1053
        %v1069 = vld [vmem:[%s260 + $0xa] sm:$0x1]
        %v1070 = vld [vmem:[%s260 + $0x1a] sm:$0x1]
        %v1071 = vld [vmem:[%s260 + $0x2a] sm:$0x1]
        %v1072 = vld [vmem:[%s260 + $0x3a] sm:$0x1]
        %v1073 = vld [vmem:[%s260 + $0xb] sm:$0x1]
        %v1074 = vld [vmem:[%s260 + $0x1b] sm:$0x1]
        %v1075 = vld [vmem:[%s260 + $0x2b] sm:$0x1]
        %v1076 = vld [vmem:[%s260 + $0x3b] sm:$0x1]
        %v1081 = vrot.slane %v1074, 7
        %v1082 = vsel %vm313, %v1081, %v1073
        %v1083 = vrot.slane %v1075, 6
        %v1084 = vsel %vm316, %v1083, %v1082
        %v1085 = vrot.slane %v1076, 5
        %v1086 = vsel %vm319, %v1085, %v1084
        %v1087 = vsel %vm328, %v1086, 0
        %1089 = vmatpush.msra.mxu0 0.0
        %1090 = vmatpush.msra.mxu0 0.0
        %1091 = vmatpush.msra.mxu0 0.0
        %1092 = vmatpush.msra.mxu0 0.0
        %1093 = vmatpush.msra.mxu0 0.0
        %1094 = vmatpush.msra.mxu0 0.0
        %1095 = vmatpush.msra.mxu0 0.0
        %1096 = vmatpush.msra.mxu0 0.0
        %1097 = vmatpush.msra.mxu0 0.0
        %1098 = vmatpush.msra.mxu0 0.0
        %1099 = vmatpush.msra.mxu0 0.0
        %1100 = vmatpush.msra.mxu0 0.0
        %1101 = vmatpush.msra.mxu0 0.0
        %1102 = vmatpush.msra.mxu0 0.0
        %1103 = vmatpush.msra.mxu0 0.0
        %1104 = vmatpush.msra.mxu0 %v1087
        %1105 = vmatmul.f32.gmra.mxu0 %v323
        %v1106 = vpop.f32.mrf.mxu0
        %v1107 = vadd.f32 0.0, %v1106
        %1108 = vmatmul.f32.gmra.mxu0 %v326
        %v1109 = vpop.f32.mrf.mxu0
        %v1110 = vadd.f32 0.0, %v1109
        %1111 = vdwg.mxu0
        %v1116 = vrot.slane %v1070, 7
        %v1117 = vsel %vm313, %v1116, %v1069
        %v1118 = vrot.slane %v1071, 6
        %v1119 = vsel %vm316, %v1118, %v1117
        %v1120 = vrot.slane %v1072, 5
        %v1121 = vsel %vm319, %v1120, %v1119
        %v1122 = vsel %vm328, %v1121, 0
        %1124 = vmatpush.msra.mxu0 0.0
        %1125 = vmatpush.msra.mxu0 0.0
        %1126 = vmatpush.msra.mxu0 0.0
        %1127 = vmatpush.msra.mxu0 0.0
        %1128 = vmatpush.msra.mxu0 0.0
        %1129 = vmatpush.msra.mxu0 0.0
        %1130 = vmatpush.msra.mxu0 0.0
        %1131 = vmatpush.msra.mxu0 0.0
        %1132 = vmatpush.msra.mxu0 0.0
        %1133 = vmatpush.msra.mxu0 0.0
        %1134 = vmatpush.msra.mxu0 0.0
        %1135 = vmatpush.msra.mxu0 0.0
        %1136 = vmatpush.msra.mxu0 0.0
        %1137 = vmatpush.msra.mxu0 0.0
        %1138 = vmatpush.msra.mxu0 0.0
        %1139 = vmatpush.msra.mxu0 %v1122
        %1140 = vmatmul.f32.gmra.mxu0 %v365
        %v1141 = vpop.f32.mrf.mxu0
        %v1142 = vadd.f32 %v1107, %v1141
        %1143 = vmatmul.f32.gmra.mxu0 %v368
        %v1144 = vpop.f32.mrf.mxu0
        %v1145 = vadd.f32 %v1110, %v1144
        %1146 = vdwg.mxu0
        %v1148 = vsel %vm395, %v1145, 0
        %1150 = vmatpush.msra.mxu0 0.0
        %1151 = vmatpush.msra.mxu0 0.0
        %1152 = vmatpush.msra.mxu0 0.0
        %1153 = vmatpush.msra.mxu0 0.0
        %1154 = vmatpush.msra.mxu0 0.0
        %1155 = vmatpush.msra.mxu0 0.0
        %1156 = vmatpush.msra.mxu0 0.0
        %1157 = vmatpush.msra.mxu0 0.0
        %1158 = vmatpush.msra.mxu0 0.0
        %1159 = vmatpush.msra.mxu0 0.0
        %1160 = vmatpush.msra.mxu0 0.0
        %1161 = vmatpush.msra.mxu0 0.0
        %1162 = vmatpush.msra.mxu0 0.0
        %1163 = vmatpush.msra.mxu0 0.0
        %1164 = vmatpush.msra.mxu0 %v298
        %1165 = vmatpush.msra.mxu0 %v297
        %1166 = vmatmul.f32.gmra.mxu0 %v1148
        %v1167 = vpop.f32.mrf.mxu0
        %v1168 = vadd.f32 0.0, %v1167
        %1169 = vdwg.mxu0
        %v1171 = vsel %vm395, %v1142, 0
        %1173 = vmatpush.msra.mxu0 0.0
        %1174 = vmatpush.msra.mxu0 0.0
        %1175 = vmatpush.msra.mxu0 0.0
        %1176 = vmatpush.msra.mxu0 0.0
        %1177 = vmatpush.msra.mxu0 0.0
        %1178 = vmatpush.msra.mxu0 0.0
        %1179 = vmatpush.msra.mxu0 0.0
        %1180 = vmatpush.msra.mxu0 0.0
        %1181 = vmatpush.msra.mxu0 0.0
        %1182 = vmatpush.msra.mxu0 0.0
        %1183 = vmatpush.msra.mxu0 0.0
        %1184 = vmatpush.msra.mxu0 0.0
        %1185 = vmatpush.msra.mxu0 0.0
        %1186 = vmatpush.msra.mxu0 0.0
        %1187 = vmatpush.msra.mxu0 %v296
        %1188 = vmatpush.msra.mxu0 %v295
        %1189 = vmatmul.f32.gmra.mxu0 %v1171
        %v1190 = vpop.f32.mrf.mxu0
        %v1191 = vadd.f32 %v1168, %v1190
        %1192 = vdwg.mxu0
        %v1193 = vadd.f32 %v1191, %v445
        %v1194 = vmax.f32 %v1193, 0.0
        %v1196 = vrot.slane %v1194, 1
        %v1197 = vrot.slane %v1194, 2
        %v1198 = vrot.slane %v1194, 3
        %v1199 = vrot.slane %v1194, 4
        %v1200 = vrot.slane %v1194, 5
        %v1201 = vrot.slane %v1194, 6
        %v1202 = vrot.slane %v1194, 7
        %1210 = vst.msk [vmem:[%s289 + $0x5] sm:$0x1] %vm464, %v1194
        %1211 = vst.msk [vmem:[%s289 + $0xd] sm:$0x1] %vm464, %v1196
        %1212 = vst.msk [vmem:[%s289 + $0x15] sm:$0x1] %vm464, %v1197
        %1213 = vst.msk [vmem:[%s289 + $0x1d] sm:$0x1] %vm464, %v1198
        %1214 = vst.msk [vmem:[%s289 + $0x25] sm:$0x1] %vm464, %v1199
        %1215 = vst.msk [vmem:[%s289 + $0x2d] sm:$0x1] %vm464, %v1200
        %1216 = vst.msk [vmem:[%s289 + $0x35] sm:$0x1] %vm464, %v1201
        %1217 = vst.msk [vmem:[%s289 + $0x3d] sm:$0x1] %vm464, %v1202
        %v1218 = vld [vmem:[%s260 + $0xc] sm:$0x1]
        %v1219 = vld [vmem:[%s260 + $0x1c] sm:$0x1]
        %v1220 = vld [vmem:[%s260 + $0x2c] sm:$0x1]
        %v1221 = vld [vmem:[%s260 + $0x3c] sm:$0x1]
        %v1222 = vld [vmem:[%s260 + $0xd] sm:$0x1]
        %v1223 = vld [vmem:[%s260 + $0x1d] sm:$0x1]
        %v1224 = vld [vmem:[%s260 + $0x2d] sm:$0x1]
        %v1225 = vld [vmem:[%s260 + $0x3d] sm:$0x1]
        %v1230 = vrot.slane %v1223, 7
        %v1231 = vsel %vm313, %v1230, %v1222
        %v1232 = vrot.slane %v1224, 6
        %v1233 = vsel %vm316, %v1232, %v1231
        %v1234 = vrot.slane %v1225, 5
        %v1235 = vsel %vm319, %v1234, %v1233
        %v1236 = vsel %vm328, %v1235, 0
        %1238 = vmatpush.msra.mxu0 0.0
        %1239 = vmatpush.msra.mxu0 0.0
        %1240 = vmatpush.msra.mxu0 0.0
        %1241 = vmatpush.msra.mxu0 0.0
        %1242 = vmatpush.msra.mxu0 0.0
        %1243 = vmatpush.msra.mxu0 0.0
        %1244 = vmatpush.msra.mxu0 0.0
        %1245 = vmatpush.msra.mxu0 0.0
        %1246 = vmatpush.msra.mxu0 0.0
        %1247 = vmatpush.msra.mxu0 0.0
        %1248 = vmatpush.msra.mxu0 0.0
        %1249 = vmatpush.msra.mxu0 0.0
        %1250 = vmatpush.msra.mxu0 0.0
        %1251 = vmatpush.msra.mxu0 0.0
        %1252 = vmatpush.msra.mxu0 0.0
        %1253 = vmatpush.msra.mxu0 %v1236
        %1254 = vmatmul.f32.gmra.mxu0 %v323
        %v1255 = vpop.f32.mrf.mxu0
        %v1256 = vadd.f32 0.0, %v1255
        %1257 = vmatmul.f32.gmra.mxu0 %v326
        %v1258 = vpop.f32.mrf.mxu0
        %v1259 = vadd.f32 0.0, %v1258
        %1260 = vdwg.mxu0
        %v1265 = vrot.slane %v1219, 7
        %v1266 = vsel %vm313, %v1265, %v1218
        %v1267 = vrot.slane %v1220, 6
        %v1268 = vsel %vm316, %v1267, %v1266
        %v1269 = vrot.slane %v1221, 5
        %v1270 = vsel %vm319, %v1269, %v1268
        %v1271 = vsel %vm328, %v1270, 0
        %1273 = vmatpush.msra.mxu0 0.0
        %1274 = vmatpush.msra.mxu0 0.0
        %1275 = vmatpush.msra.mxu0 0.0
        %1276 = vmatpush.msra.mxu0 0.0
        %1277 = vmatpush.msra.mxu0 0.0
        %1278 = vmatpush.msra.mxu0 0.0
        %1279 = vmatpush.msra.mxu0 0.0
        %1280 = vmatpush.msra.mxu0 0.0
        %1281 = vmatpush.msra.mxu0 0.0
        %1282 = vmatpush.msra.mxu0 0.0
        %1283 = vmatpush.msra.mxu0 0.0
        %1284 = vmatpush.msra.mxu0 0.0
        %1285 = vmatpush.msra.mxu0 0.0
        %1286 = vmatpush.msra.mxu0 0.0
        %1287 = vmatpush.msra.mxu0 0.0
        %1288 = vmatpush.msra.mxu0 %v1271
        %1289 = vmatmul.f32.gmra.mxu0 %v365
        %v1290 = vpop.f32.mrf.mxu0
        %v1291 = vadd.f32 %v1256, %v1290
        %1292 = vmatmul.f32.gmra.mxu0 %v368
        %v1293 = vpop.f32.mrf.mxu0
        %v1294 = vadd.f32 %v1259, %v1293
        %1295 = vdwg.mxu0
        %v1297 = vsel %vm395, %v1294, 0
        %1299 = vmatpush.msra.mxu0 0.0
        %1300 = vmatpush.msra.mxu0 0.0
        %1301 = vmatpush.msra.mxu0 0.0
        %1302 = vmatpush.msra.mxu0 0.0
        %1303 = vmatpush.msra.mxu0 0.0
        %1304 = vmatpush.msra.mxu0 0.0
        %1305 = vmatpush.msra.mxu0 0.0
        %1306 = vmatpush.msra.mxu0 0.0
        %1307 = vmatpush.msra.mxu0 0.0
        %1308 = vmatpush.msra.mxu0 0.0
        %1309 = vmatpush.msra.mxu0 0.0
        %1310 = vmatpush.msra.mxu0 0.0
        %1311 = vmatpush.msra.mxu0 0.0
        %1312 = vmatpush.msra.mxu0 0.0
        %1313 = vmatpush.msra.mxu0 %v298
        %1314 = vmatpush.msra.mxu0 %v297
        %1315 = vmatmul.f32.gmra.mxu0 %v1297
        %v1316 = vpop.f32.mrf.mxu0
        %v1317 = vadd.f32 0.0, %v1316
        %1318 = vdwg.mxu0
        %v1320 = vsel %vm395, %v1291, 0
        %1322 = vmatpush.msra.mxu0 0.0
        %1323 = vmatpush.msra.mxu0 0.0
        %1324 = vmatpush.msra.mxu0 0.0
        %1325 = vmatpush.msra.mxu0 0.0
        %1326 = vmatpush.msra.mxu0 0.0
        %1327 = vmatpush.msra.mxu0 0.0
        %1328 = vmatpush.msra.mxu0 0.0
        %1329 = vmatpush.msra.mxu0 0.0
        %1330 = vmatpush.msra.mxu0 0.0
        %1331 = vmatpush.msra.mxu0 0.0
        %1332 = vmatpush.msra.mxu0 0.0
        %1333 = vmatpush.msra.mxu0 0.0
        %1334 = vmatpush.msra.mxu0 0.0
        %1335 = vmatpush.msra.mxu0 0.0
        %1336 = vmatpush.msra.mxu0 %v296
        %1337 = vmatpush.msra.mxu0 %v295
        %1338 = vmatmul.f32.gmra.mxu0 %v1320
        %v1339 = vpop.f32.mrf.mxu0
        %v1340 = vadd.f32 %v1317, %v1339
        %1341 = vdwg.mxu0
        %v1342 = vadd.f32 %v1340, %v445
        %v1343 = vmax.f32 %v1342, 0.0
        %v1345 = vrot.slane %v1343, 1
        %v1346 = vrot.slane %v1343, 2
        %v1347 = vrot.slane %v1343, 3
        %v1348 = vrot.slane %v1343, 4
        %v1349 = vrot.slane %v1343, 5
        %v1350 = vrot.slane %v1343, 6
        %v1351 = vrot.slane %v1343, 7
        %1359 = vst.msk [vmem:[%s289 + $0x6] sm:$0x1] %vm464, %v1343
        %1360 = vst.msk [vmem:[%s289 + $0xe] sm:$0x1] %vm464, %v1345
        %1361 = vst.msk [vmem:[%s289 + $0x16] sm:$0x1] %vm464, %v1346
        %1362 = vst.msk [vmem:[%s289 + $0x1e] sm:$0x1] %vm464, %v1347
        %1363 = vst.msk [vmem:[%s289 + $0x26] sm:$0x1] %vm464, %v1348
        %1364 = vst.msk [vmem:[%s289 + $0x2e] sm:$0x1] %vm464, %v1349
        %1365 = vst.msk [vmem:[%s289 + $0x36] sm:$0x1] %vm464, %v1350
        %1366 = vst.msk [vmem:[%s289 + $0x3e] sm:$0x1] %vm464, %v1351
        %v1367 = vld [vmem:[%s260 + $0xe] sm:$0x1]
        %v1368 = vld [vmem:[%s260 + $0x1e] sm:$0x1]
        %v1369 = vld [vmem:[%s260 + $0x2e] sm:$0x1]
        %v1370 = vld [vmem:[%s260 + $0x3e] sm:$0x1]
        %v1371 = vld [vmem:[%s260 + $0xf] sm:$0x1]
        %v1372 = vld [vmem:[%s260 + $0x1f] sm:$0x1]
        %v1373 = vld [vmem:[%s260 + $0x2f] sm:$0x1]
        %v1374 = vld [vmem:[%s260 + $0x3f] sm:$0x1]
        %v1379 = vrot.slane %v1372, 7
        %v1380 = vsel %vm313, %v1379, %v1371
        %v1381 = vrot.slane %v1373, 6
        %v1382 = vsel %vm316, %v1381, %v1380
        %v1383 = vrot.slane %v1374, 5
        %v1384 = vsel %vm319, %v1383, %v1382
        %v1385 = vsel %vm328, %v1384, 0
        %1387 = vmatpush.msra.mxu0 0.0
        %1388 = vmatpush.msra.mxu0 0.0
        %1389 = vmatpush.msra.mxu0 0.0
        %1390 = vmatpush.msra.mxu0 0.0
        %1391 = vmatpush.msra.mxu0 0.0
        %1392 = vmatpush.msra.mxu0 0.0
        %1393 = vmatpush.msra.mxu0 0.0
        %1394 = vmatpush.msra.mxu0 0.0
        %1395 = vmatpush.msra.mxu0 0.0
        %1396 = vmatpush.msra.mxu0 0.0
        %1397 = vmatpush.msra.mxu0 0.0
        %1398 = vmatpush.msra.mxu0 0.0
        %1399 = vmatpush.msra.mxu0 0.0
        %1400 = vmatpush.msra.mxu0 0.0
        %1401 = vmatpush.msra.mxu0 0.0
        %1402 = vmatpush.msra.mxu0 %v1385
        %1403 = vmatmul.f32.gmra.mxu0 %v323
        %v1404 = vpop.f32.mrf.mxu0
        %v1405 = vadd.f32 0.0, %v1404
        %1406 = vmatmul.f32.gmra.mxu0 %v326
        %v1407 = vpop.f32.mrf.mxu0
        %v1408 = vadd.f32 0.0, %v1407
        %1409 = vdwg.mxu0
        %v1414 = vrot.slane %v1368, 7
        %v1415 = vsel %vm313, %v1414, %v1367
        %v1416 = vrot.slane %v1369, 6
        %v1417 = vsel %vm316, %v1416, %v1415
        %v1418 = vrot.slane %v1370, 5
        %v1419 = vsel %vm319, %v1418, %v1417
        %v1420 = vsel %vm328, %v1419, 0
        %1422 = vmatpush.msra.mxu0 0.0
        %1423 = vmatpush.msra.mxu0 0.0
        %1424 = vmatpush.msra.mxu0 0.0
        %1425 = vmatpush.msra.mxu0 0.0
        %1426 = vmatpush.msra.mxu0 0.0
        %1427 = vmatpush.msra.mxu0 0.0
        %1428 = vmatpush.msra.mxu0 0.0
        %1429 = vmatpush.msra.mxu0 0.0
        %1430 = vmatpush.msra.mxu0 0.0
        %1431 = vmatpush.msra.mxu0 0.0
        %1432 = vmatpush.msra.mxu0 0.0
        %1433 = vmatpush.msra.mxu0 0.0
        %1434 = vmatpush.msra.mxu0 0.0
        %1435 = vmatpush.msra.mxu0 0.0
        %1436 = vmatpush.msra.mxu0 0.0
        %1437 = vmatpush.msra.mxu0 %v1420
        %1438 = vmatmul.f32.gmra.mxu0 %v365
        %v1439 = vpop.f32.mrf.mxu0
        %v1440 = vadd.f32 %v1405, %v1439
        %1441 = vmatmul.f32.gmra.mxu0 %v368
        %v1442 = vpop.f32.mrf.mxu0
        %v1443 = vadd.f32 %v1408, %v1442
        %1444 = vdwg.mxu0
        %v1446 = vsel %vm395, %v1443, 0
        %1448 = vmatpush.msra.mxu0 0.0
        %1449 = vmatpush.msra.mxu0 0.0
        %1450 = vmatpush.msra.mxu0 0.0
        %1451 = vmatpush.msra.mxu0 0.0
        %1452 = vmatpush.msra.mxu0 0.0
        %1453 = vmatpush.msra.mxu0 0.0
        %1454 = vmatpush.msra.mxu0 0.0
        %1455 = vmatpush.msra.mxu0 0.0
        %1456 = vmatpush.msra.mxu0 0.0
        %1457 = vmatpush.msra.mxu0 0.0
        %1458 = vmatpush.msra.mxu0 0.0
        %1459 = vmatpush.msra.mxu0 0.0
        %1460 = vmatpush.msra.mxu0 0.0
        %1461 = vmatpush.msra.mxu0 0.0
        %1462 = vmatpush.msra.mxu0 %v298
        %1463 = vmatpush.msra.mxu0 %v297
        %1464 = vmatmul.f32.gmra.mxu0 %v1446
        %v1465 = vpop.f32.mrf.mxu0
        %v1466 = vadd.f32 0.0, %v1465
        %1467 = vdwg.mxu0
        %v1469 = vsel %vm395, %v1440, 0
        %1471 = vmatpush.msra.mxu0 0.0
        %1472 = vmatpush.msra.mxu0 0.0
        %1473 = vmatpush.msra.mxu0 0.0
        %1474 = vmatpush.msra.mxu0 0.0
        %1475 = vmatpush.msra.mxu0 0.0
        %1476 = vmatpush.msra.mxu0 0.0
        %1477 = vmatpush.msra.mxu0 0.0
        %1478 = vmatpush.msra.mxu0 0.0
        %1479 = vmatpush.msra.mxu0 0.0
        %1480 = vmatpush.msra.mxu0 0.0
        %1481 = vmatpush.msra.mxu0 0.0
        %1482 = vmatpush.msra.mxu0 0.0
        %1483 = vmatpush.msra.mxu0 0.0
        %1484 = vmatpush.msra.mxu0 0.0
        %1485 = vmatpush.msra.mxu0 %v296
        %1486 = vmatpush.msra.mxu0 %v295
        %1487 = vmatmul.f32.gmra.mxu0 %v1469
        %v1488 = vpop.f32.mrf.mxu0
        %v1489 = vadd.f32 %v1466, %v1488
        %1490 = vdwg.mxu0
        %v1491 = vadd.f32 %v1489, %v445
        %v1492 = vmax.f32 %v1491, 0.0
        %v1494 = vrot.slane %v1492, 1
        %v1495 = vrot.slane %v1492, 2
        %v1496 = vrot.slane %v1492, 3
        %v1497 = vrot.slane %v1492, 4
        %v1498 = vrot.slane %v1492, 5
        %v1499 = vrot.slane %v1492, 6
        %v1500 = vrot.slane %v1492, 7
        %1508 = vst.msk [vmem:[%s289 + $0x7] sm:$0x1] %vm464, %v1492
        %1509 = vst.msk [vmem:[%s289 + $0xf] sm:$0x1] %vm464, %v1494
        %1510 = vst.msk [vmem:[%s289 + $0x17] sm:$0x1] %vm464, %v1495
        %1511 = vst.msk [vmem:[%s289 + $0x1f] sm:$0x1] %vm464, %v1496
        %1512 = vst.msk [vmem:[%s289 + $0x27] sm:$0x1] %vm464, %v1497
        %1513 = vst.msk [vmem:[%s289 + $0x2f] sm:$0x1] %vm464, %v1498
        %1514 = vst.msk [vmem:[%s289 + $0x37] sm:$0x1] %vm464, %v1499
        %1515 = vst.msk [vmem:[%s289 + $0x3f] sm:$0x1] %vm464, %v1500
        %s1516 = sand.u32 %s178, 1
        %s1517 = scalar_lea.sflag [#allocation4], %s1516
        %s1518 = sand.u32 %s178, 1
        %s1519 = smul.addr %s1518, 64
        %s1520 = scalar_lea.vmem [#allocation5], %s1519
        // Predicated region
        $region49: #{tpu_custom_call.1} parent=43 // pred_check
          %p1521 = pneg %p188
        $region50: #{tpu_custom_call.1} parent=43 // pred_check_branch
          %1523 = sbr.rel (%p1521) target = $region52
        $region51: #{tpu_custom_call.1} parent=43 // pred_region
          %1525 = vsyncadd %s1517, 0
          %s1526 = smul.addr %s27, 8
          %s1527 = sadd.s32 %s28, %s1526
          %s1528 = smul.addr %s1527, 8
          %s1529 = scalar_lea.hbm %s6, %s1528
          %s1530 = sshll.u32 %s1520, 4
          %s1531 = int_to_ptr.vmem [resolvable:$true] %s1530
          %s1532 = sshll.u32 %s1529, 4
          %s1533 = int_to_ptr.hbm [resolvable:$true] %s1532
          %1538 = dma.vmem_to_hbm [thread:$0]  %s1531, 1024, %s1533, %s1517, 128, 128, 8
        $region52: #{tpu_custom_call.1} parent=43 // pred_fallthru
          _
      $region44: #{tpu_custom_call.1} parent=5 // pred_fallthru
        _
      %p1539 = scmp.le.s32.totalorder 2, %s18
      // Predicated region
      $region53: #{tpu_custom_call.1} parent=5 // pred_check
        %p1540 = pneg %p1539
      $region54: #{tpu_custom_call.1} parent=5 // pred_check_branch
        %1542 = sbr.rel (%p1540) target = $region56
      $region55: #{tpu_custom_call.1} parent=5 // pred_region
        %s1543 = ssub.s32 %s18, 2
        // Predicated region
        $region57: #{tpu_custom_call.1} parent=55 // pred_check
          %p1544 = pneg %p194
        $region58: #{tpu_custom_call.1} parent=55 // pred_check_branch
          %1546 = sbr.rel (%p1544) target = $region60
        $region59: #{tpu_custom_call.1} parent=55 // pred_region
          %s1547 = sand.u32 %s179, 1
          %s1548 = scalar_lea.sflag [#allocation4], %s1547
          %s1549 = sand.u32 %s179, 1
          %s1550 = smul.addr %s1549, 64
          %s1551 = scalar_lea.vmem [#allocation5], %s1550
          %1553 = dma.done %s1548, 1024
        $region60: #{tpu_custom_call.1} parent=55 // pred_fallthru
          _
      $region56: #{tpu_custom_call.1} parent=5 // pred_fallthru
        _
    $region6: #{tpu_custom_call.1} parent=1 // loop_footer
      %s22 = sadd.s32 1, %s18
    $region7: #{tpu_custom_call.1} parent=1 // loop_footer_branch
      %17 = sbr.rel target = $region3
    $region8: #{tpu_custom_call.1} parent=1 // loop_exit
      _
    %1554 = vsyncpa [#allocation3], 1
    %s1555 = scalar_lea.sflag [#allocation3], 1
    %1556 = vsyncpa %s1555, 1
    %1557 = vsyncpa [#allocation4], 1
    %s1558 = scalar_lea.sflag [#allocation4], 1
    %1559 = vsyncpa %s1558, 1

</llo_original>
